<compile_context>
chip_gen: v7x
topology: tpu7x:2x2x1
jax: 0.10.0
libtpu: 0.0.40
codegen_flags: <defaults>
</compile_context>

<pallas_src>
import math
import jax
import jax.numpy as jnp
from jax.experimental import pallas as pl
from jax.experimental.pallas import tpu as pltpu


# ----------------------------- Pallas kernels -------------------------------

def _make_split_kernel(nbranch):
    # refs: [x_i, sc_i, sh_i, w_i, b_i] * nbranch  ++  [o_i] * nbranch
    def kernel(*refs):
        for i in range(nbranch):
            x_ref, sc_ref, sh_ref, w_ref, b_ref = refs[5 * i:5 * i + 5]
            o_ref = refs[5 * nbranch + i]
            # BN(+folded 1/HW) + ReLU on the VPU, f32.
            z = jnp.maximum(x_ref[...] * sc_ref[...] + sh_ref[...], 0.0)
            pooled = jnp.sum(z, axis=-1)                      # (N, C_i) global avg-pool
            o_ref[...] = jnp.dot(pooled.astype(jnp.bfloat16), w_ref[...],
                                 preferred_element_type=jnp.float32) + b_ref[...]
    return kernel


def _make_merge_kernel(nbranch):
    # refs: [x_i, sc_i, sh_i, w_i] * nbranch  ++  [bias, out]
    def kernel(*refs):
        b_ref = refs[4 * nbranch]
        o_ref = refs[4 * nbranch + 1]
        acc = b_ref[...]                                      # bias added exactly once
        for i in range(nbranch):
            x_ref, sc_ref, sh_ref, w_ref = refs[4 * i:4 * i + 4]
            z = jnp.maximum(x_ref[...] * sc_ref[...] + sh_ref[...], 0.0)
            pooled = jnp.sum(z, axis=-1)                      # (N, C_i)
            acc = acc + jnp.dot(pooled.astype(jnp.bfloat16), w_ref[...],
                                preferred_element_type=jnp.float32)
        o_ref[...] = acc
    return kernel


def _choose_tn(nclass):
    # Lane-dense output tiles.  When nclass is 128-aligned and big enough,
    # split it into >=2 blocks on a "parallel" grid axis (v7x has 2 TCs);
    # otherwise use one full block (full-extent dims satisfy the (8,128) rule
    # and a tiny grid would only add per-step pipeline overhead).
    if nclass % 128 == 0 and nclass >= 256:
        half = 128 * pl.cdiv(nclass // 128, 2)
        return min(half, 2048)      # keep blocks comfortably inside v7x's 64 MiB VMEM
    return nclass


def _branch_kernel_inputs(xi, bn_scale, bn_shift, nclass, tn):
    """Common per-branch (x3, sc, sh) prep + BlockSpecs.  Returns (vals, specs)."""
    N, C, H, W = xi.shape
    HW = H * W
    inv = 1.0 / float(HW)
    # relu(z)/HW == relu(z/HW): fold the mean factor into BN scale/shift.
    sc = (bn_scale * inv).reshape(1, C, 1)
    sh = (bn_shift * inv).reshape(1, C, 1)
    x3 = xi.reshape(N, C, HW)                 # no transpose: spatial -> lanes
    vals = [x3, sc, sh]
    specs = [
        pl.BlockSpec((N, C, HW), lambda j: (0, 0, 0)),   # grid-invariant block
        pl.BlockSpec((1, C, 1), lambda j: (0, 0, 0)),
        pl.BlockSpec((1, C, 1), lambda j: (0, 0, 0)),
    ]
    return vals, specs


def split_heads_fused(feats, branch_params, nclass):
    """All 'split' classifier heads in ONE pallas_call.

    feats / branch_params are in forward (reversed) order; returns a list of
    (N, nclass) logits in that same order.
    """
    nb = len(feats)
    N = feats[0].shape[0]
    tn = _choose_tn(nclass)
    grid = (pl.cdiv(nclass, tn),)

    inputs, in_specs = [], []
    for xi, bp in zip(feats, branch_params):
        C = xi.shape[1]
        vals, specs = _branch_kernel_inputs(xi, bp['bn_scale'], bp['bn_shift'], nclass, tn)
        inputs += vals + [bp['w_t'].astype(jnp.bfloat16),
                          bp['bias'].reshape(1, nclass).astype(jnp.float32)]
        in_specs += specs + [
            pl.BlockSpec((C, tn), lambda j: (0, j)),
            pl.BlockSpec((1, tn), lambda j: (0, j)),
        ]

    out_shape = tuple(jax.ShapeDtypeStruct((N, nclass), jnp.float32) for _ in range(nb))
    out_specs = tuple(pl.BlockSpec((N, tn), lambda j: (0, j)) for _ in range(nb))

    outs = pl.pallas_call(
        _make_split_kernel(nb),
        out_shape=out_shape,
        grid=grid,
        in_specs=in_specs,
        out_specs=out_specs,
        compiler_params=pltpu.CompilerParams(dimension_semantics=("parallel",)),
    )(*inputs)
    return list(outs)


def merge_head_fused(feats, branch_params, w_slices, bias, nclass):
    """'merge' head (cat of pooled features -> one Linear) in ONE pallas_call.

    Linear(cat(p_i)) == sum_i p_i @ W_rows_i (+ bias once); the per-branch row
    slices are accumulated in-register inside the kernel.
    """
    nb = len(feats)
    N = feats[0].shape[0]
    tn = _choose_tn(nclass)
    grid = (pl.cdiv(nclass, tn),)

    inputs, in_specs = [], []
    for xi, bp, w in zip(feats, branch_params, w_slices):
        C = xi.shape[1]
        vals, specs = _branch_kernel_inputs(xi, bp['bn_scale'], bp['bn_shift'], nclass, tn)
        inputs += vals + [w.astype(jnp.bfloat16)]
        in_specs += specs + [pl.BlockSpec((C, tn), lambda j: (0, j))]
    inputs.append(bias.reshape(1, nclass).astype(jnp.float32))
    in_specs.append(pl.BlockSpec((1, tn), lambda j: (0, j)))

    return pl.pallas_call(
        _make_merge_kernel(nb),
        out_shape=jax.ShapeDtypeStruct((N, nclass), jnp.float32),
        grid=grid,
        in_specs=in_specs,
        out_specs=pl.BlockSpec((N, tn), lambda j: (0, j)),
        compiler_params=pltpu.CompilerParams(dimension_semantics=("parallel",)),
    )(*inputs)


# --------------------------- parameter building ----------------------------

def _make_bn_fold(key, c, eps=1e-5):
    k1, k2, k3, k4 = jax.random.split(key, 4)
    gamma = 1.0 + 0.1 * jax.random.normal(k1, (c,), jnp.float32)
    beta = 0.1 * jax.random.normal(k2, (c,), jnp.float32)
    mean = 0.1 * jax.random.normal(k3, (c,), jnp.float32)
    var = 1.0 + 0.1 * jax.random.uniform(k4, (c,), jnp.float32)
    scale = gamma / jnp.sqrt(var + eps)
    shift = beta - mean * scale
    return scale, shift


def init_summary_block(key, indepth, nclass, method='split'):
    branch = len(indepth)
    keys = jax.random.split(key, 3 * branch + 2)
    params = {'branches': [], 'method': method, 'nclass': nclass}
    for i, c in enumerate(indepth):
        kb, kw, kbi = keys[3 * i], keys[3 * i + 1], keys[3 * i + 2]
        scale, shift = _make_bn_fold(kb, c)
        bp = {'bn_scale': scale, 'bn_shift': shift}
        if method == 'split':
            std = 1.0 / math.sqrt(c)
            bp['w_t'] = std * jax.random.normal(kw, (c, nclass), jnp.float32)
            bp['bias'] = std * jax.random.normal(kbi, (nclass,), jnp.float32)
        params['branches'].append(bp)
    if method == 'merge':
        ctot = sum(indepth)
        std = 1.0 / math.sqrt(ctot)
        # rows follow the *concatenation* order of the merge path, which is the
        # reversed branch order (see SummaryBlock.forward).
        params['merge_w_t'] = std * jax.random.normal(keys[-2], (ctot, nclass), jnp.float32)
        params['merge_bias'] = std * jax.random.normal(keys[-1], (nclass,), jnp.float32)
    return params


# ------------------------------ forward pass -------------------------------

def summary_block_forward(x, params, active_fc=True):
    """x = (x_1, ..., x_branch, pred_list); mirrors SummaryBlock.forward."""
    if not active_fc:
        return x
    branch = len(params['branches'])
    method = params['method']
    nclass = params['nclass']
    feats = list(x[:branch])[::-1]                              # reversed branch order
    bps = [params['branches'][branch - 1 - i] for i in range(branch)]  # aligned to feats
    pred = list(x[-1])
    if method == 'split':
        pred.extend(split_heads_fused(feats, bps, nclass))
        return pred
    # merge: weight rows follow the concat (= feats) order.
    w_t = params['merge_w_t']
    w_slices, off = [], 0
    for bp in bps:
        c = bp['bn_scale'].shape[0]
        w_slices.append(w_t[off:off + c])
        off += c
    pred.append(merge_head_fused(feats, bps, w_slices, params['merge_bias'], nclass))
    return pred


# ------------------------------ pure-JAX reference --------------------------

def summary_block_reference(x, params, active_fc=True):
    if not active_fc:
        return x
    branch = len(params['branches'])
    method = params['method']
    feats = list(x[:branch])[::-1]
    pred = list(x[-1])
    pooled = []
    for i, xi in enumerate(feats):
        bp = params['branches'][branch - 1 - i]
        z = jnp.maximum(xi * bp['bn_scale'][None, :, None, None]
                        + bp['bn_shift'][None, :, None, None], 0.0)
        pooled.append(jnp.mean(z, axis=(2, 3)))
    if method == 'split':
        for i, p in enumerate(pooled):
            bp = params['branches'][branch - 1 - i]
            pred.append(p @ bp['w_t'] + bp['bias'])
        return pred
    cat = jnp.concatenate(pooled, axis=1)
    pred.append(cat @ params['merge_w_t'] + params['merge_bias'])
    return pred


# ---------------------------------- main ------------------------------------

if __name__ == "__main__":
    key = jax.random.PRNGKey(0)
    kx, kp1, kp2 = jax.random.split(key, 3)

    N = 2
    indepth = [4, 8, 16]          # per-branch channels
    spatial = [16, 8, 4]          # per-branch feature-map sizes
    nclass = 256                  # 128-aligned -> 2 lane-dense output tiles

    xs = []
    for i, (c, s) in enumerate(zip(indepth, spatial)):
        xs.append(jax.random.normal(jax.random.fold_in(kx, i),
                                    (N, c, s, s), jnp.float32))

    # ------- method='split' (module default) -------
    params_split = init_summary_block(kp1, indepth, nclass, method='split')
    pred_split = summary_block_forward(tuple(xs) + ([],), params_split)
    jax.block_until_ready(pred_split)
    ref_split = summary_block_reference(tuple(xs) + ([],), params_split)
    assert len(pred_split) == len(indepth)
    for got, want in zip(pred_split, ref_split):
        assert got.shape == (N, nclass)
        assert bool(jnp.all(jnp.isfinite(got)))
        assert bool(jnp.allclose(got, want, rtol=2e-2, atol=2e-2))

    # ------- method='merge' -------
    params_merge = init_summary_block(kp2, indepth, nclass, method='merge')
    pred_merge = summary_block_forward(tuple(xs) + ([],), params_merge)
    jax.block_until_ready(pred_merge)
    ref_merge = summary_block_reference(tuple(xs) + ([],), params_merge)
    assert len(pred_merge) == 1
    assert pred_merge[0].shape == (N, nclass)
    assert bool(jnp.all(jnp.isfinite(pred_merge[0])))
    assert bool(jnp.allclose(pred_merge[0], ref_merge[0], rtol=2e-2, atol=2e-2))

    print("KERNEL_OK")
</pallas_src>

<mosaic_0001>
module attributes {stable_mosaic.version = 11 : i64} {
  func.func @kernel(%arg0: i32, %arg1: memref<2x16x16xf32, #tpu.memory_space<vmem>>, %arg2: memref<1x16x1xf32, #tpu.memory_space<vmem>>, %arg3: memref<1x16x1xf32, #tpu.memory_space<vmem>>, %arg4: memref<16x128xbf16, #tpu.memory_space<vmem>>, %arg5: memref<1x128xf32, #tpu.memory_space<vmem>>, %arg6: memref<2x8x64xf32, #tpu.memory_space<vmem>>, %arg7: memref<1x8x1xf32, #tpu.memory_space<vmem>>, %arg8: memref<1x8x1xf32, #tpu.memory_space<vmem>>, %arg9: memref<8x128xbf16, #tpu.memory_space<vmem>>, %arg10: memref<1x128xf32, #tpu.memory_space<vmem>>, %arg11: memref<2x4x256xf32, #tpu.memory_space<vmem>>, %arg12: memref<1x4x1xf32, #tpu.memory_space<vmem>>, %arg13: memref<1x4x1xf32, #tpu.memory_space<vmem>>, %arg14: memref<4x128xbf16, #tpu.memory_space<vmem>>, %arg15: memref<1x128xf32, #tpu.memory_space<vmem>>, %arg16: memref<2x128xf32, #tpu.memory_space<vmem>>, %arg17: memref<2x128xf32, #tpu.memory_space<vmem>>, %arg18: memref<2x128xf32, #tpu.memory_space<vmem>>) attributes {dimension_semantics = [#tpu.dimension_semantics<parallel>], iteration_bounds = array<i64: 2>, scalar_prefetch = 0 : i64, scratch_operands = 0 : i64, tpu.core_type = #tpu.core_type<tc>, window_params = [{pipeline_mode = #tpu.pipeline_mode<synchronous>, transform_indices = @transform_0, window_bounds = array<i64: 2, 16, 16>}, {pipeline_mode = #tpu.pipeline_mode<synchronous>, transform_indices = @transform_1, window_bounds = array<i64: 1, 16, 1>}, {pipeline_mode = #tpu.pipeline_mode<synchronous>, transform_indices = @transform_2, window_bounds = array<i64: 1, 16, 1>}, {transform_indices = @transform_3, window_bounds = array<i64: 16, 128>}, {transform_indices = @transform_4, window_bounds = array<i64: 1, 128>}, {pipeline_mode = #tpu.pipeline_mode<synchronous>, transform_indices = @transform_5, window_bounds = array<i64: 2, 8, 64>}, {pipeline_mode = #tpu.pipeline_mode<synchronous>, transform_indices = @transform_6, window_bounds = array<i64: 1, 8, 1>}, {pipeline_mode = #tpu.pipeline_mode<synchronous>, transform_indices = @transform_7, window_bounds = array<i64: 1, 8, 1>}, {transform_indices = @transform_8, window_bounds = array<i64: 8, 128>}, {transform_indices = @transform_9, window_bounds = array<i64: 1, 128>}, {pipeline_mode = #tpu.pipeline_mode<synchronous>, transform_indices = @transform_10, window_bounds = array<i64: 2, 4, 256>}, {pipeline_mode = #tpu.pipeline_mode<synchronous>, transform_indices = @transform_11, window_bounds = array<i64: 1, 4, 1>}, {pipeline_mode = #tpu.pipeline_mode<synchronous>, transform_indices = @transform_12, window_bounds = array<i64: 1, 4, 1>}, {transform_indices = @transform_13, window_bounds = array<i64: 4, 128>}, {transform_indices = @transform_14, window_bounds = array<i64: 1, 128>}, {transform_indices = @transform_15, window_bounds = array<i64: 2, 128>}, {transform_indices = @transform_16, window_bounds = array<i64: 2, 128>}, {transform_indices = @transform_17, window_bounds = array<i64: 2, 128>}]} {
    %c0 = arith.constant 0 : index
    %c0_0 = arith.constant 0 : index
    %c0_1 = arith.constant 0 : index
    %0 = vector.load %arg1[%c0, %c0_0, %c0_1] : memref<2x16x16xf32, #tpu.memory_space<vmem>>, vector<2x16x16xf32>
    %c0_2 = arith.constant 0 : index
    %c0_3 = arith.constant 0 : index
    %c0_4 = arith.constant 0 : index
    %1 = vector.load %arg2[%c0_2, %c0_3, %c0_4] : memref<1x16x1xf32, #tpu.memory_space<vmem>>, vector<1x16x1xf32>
    %2 = vector.broadcast %1 : vector<1x16x1xf32> to vector<2x16x16xf32>
    %3 = arith.mulf %0, %2 : vector<2x16x16xf32>
    %c0_5 = arith.constant 0 : index
    %c0_6 = arith.constant 0 : index
    %c0_7 = arith.constant 0 : index
    %4 = vector.load %arg3[%c0_5, %c0_6, %c0_7] : memref<1x16x1xf32, #tpu.memory_space<vmem>>, vector<1x16x1xf32>
    %5 = vector.broadcast %4 : vector<1x16x1xf32> to vector<2x16x16xf32>
    %6 = arith.addf %3, %5 : vector<2x16x16xf32>
    %cst = arith.constant 0.000000e+00 : f32
    %7 = vector.broadcast %cst : f32 to vector<2x16x16xf32>
    %8 = arith.maximumf %6, %7 : vector<2x16x16xf32>
    %cst_8 = arith.constant dense<0.000000e+00> : vector<2x16xf32>
    %9 = vector.multi_reduction <add>, %8, %cst_8 [2] : vector<2x16x16xf32> to vector<2x16xf32>
    %10 = arith.truncf %9 : vector<2x16xf32> to vector<2x16xbf16>
    %c0_9 = arith.constant 0 : index
    %c0_10 = arith.constant 0 : index
    %11 = vector.load %arg4[%c0_9, %c0_10] : memref<16x128xbf16, #tpu.memory_space<vmem>>, vector<16x128xbf16>
    %cst_11 = arith.constant dense<0.000000e+00> : vector<2x128xf32>
    %12 = tpu.matmul %10, %11, %cst_11 {dimension_numbers = #tpu.dot_dimension_numbers<[1], [0], [0], [1], [0, 0, 1, 1], [], []>} : vector<2x16xbf16>, vector<16x128xbf16>, vector<2x128xf32> -> vector<2x128xf32>
    %c0_12 = arith.constant 0 : index
    %c0_13 = arith.constant 0 : index
    %13 = vector.load %arg5[%c0_12, %c0_13] : memref<1x128xf32, #tpu.memory_space<vmem>>, vector<1x128xf32>
    %14 = vector.broadcast %13 : vector<1x128xf32> to vector<2x128xf32>
    %15 = arith.addf %12, %14 : vector<2x128xf32>
    %c0_14 = arith.constant 0 : index
    %c0_15 = arith.constant 0 : index
    %16 = vector.load %arg16[%c0_14, %c0_15] : memref<2x128xf32, #tpu.memory_space<vmem>>, vector<2x128xf32>
    tpu.vector_store %arg16[%c0_14, %c0_15], %15 {strides = array<i32>} : memref<2x128xf32, #tpu.memory_space<vmem>>, vector<2x128xf32>,
    %c0_16 = arith.constant 0 : index
    %c0_17 = arith.constant 0 : index
    %c0_18 = arith.constant 0 : index
    %17 = vector.load %arg6[%c0_16, %c0_17, %c0_18] : memref<2x8x64xf32, #tpu.memory_space<vmem>>, vector<2x8x64xf32>
    %c0_19 = arith.constant 0 : index
    %c0_20 = arith.constant 0 : index
    %c0_21 = arith.constant 0 : index
    %18 = vector.load %arg7[%c0_19, %c0_20, %c0_21] : memref<1x8x1xf32, #tpu.memory_space<vmem>>, vector<1x8x1xf32>
    %19 = vector.broadcast %18 : vector<1x8x1xf32> to vector<2x8x64xf32>
    %20 = arith.mulf %17, %19 : vector<2x8x64xf32>
    %c0_22 = arith.constant 0 : index
    %c0_23 = arith.constant 0 : index
    %c0_24 = arith.constant 0 : index
    %21 = vector.load %arg8[%c0_22, %c0_23, %c0_24] : memref<1x8x1xf32, #tpu.memory_space<vmem>>, vector<1x8x1xf32>
    %22 = vector.broadcast %21 : vector<1x8x1xf32> to vector<2x8x64xf32>
    %23 = arith.addf %20, %22 : vector<2x8x64xf32>
    %cst_25 = arith.constant 0.000000e+00 : f32
    %24 = vector.broadcast %cst_25 : f32 to vector<2x8x64xf32>
    %25 = arith.maximumf %23, %24 : vector<2x8x64xf32>
    %cst_26 = arith.constant dense<0.000000e+00> : vector<2x8xf32>
    %26 = vector.multi_reduction <add>, %25, %cst_26 [2] : vector<2x8x64xf32> to vector<2x8xf32>
    %27 = arith.truncf %26 : vector<2x8xf32> to vector<2x8xbf16>
    %c0_27 = arith.constant 0 : index
    %c0_28 = arith.constant 0 : index
    %28 = vector.load %arg9[%c0_27, %c0_28] : memref<8x128xbf16, #tpu.memory_space<vmem>>, vector<8x128xbf16>
    %cst_29 = arith.constant dense<0.000000e+00> : vector<2x128xf32>
    %29 = tpu.matmul %27, %28, %cst_29 {dimension_numbers = #tpu.dot_dimension_numbers<[1], [0], [0], [1], [0, 0, 1, 1], [], []>} : vector<2x8xbf16>, vector<8x128xbf16>, vector<2x128xf32> -> vector<2x128xf32>
    %c0_30 = arith.constant 0 : index
    %c0_31 = arith.constant 0 : index
    %30 = vector.load %arg10[%c0_30, %c0_31] : memref<1x128xf32, #tpu.memory_space<vmem>>, vector<1x128xf32>
    %31 = vector.broadcast %30 : vector<1x128xf32> to vector<2x128xf32>
    %32 = arith.addf %29, %31 : vector<2x128xf32>
    %c0_32 = arith.constant 0 : index
    %c0_33 = arith.constant 0 : index
    %33 = vector.load %arg17[%c0_32, %c0_33] : memref<2x128xf32, #tpu.memory_space<vmem>>, vector<2x128xf32>
    tpu.vector_store %arg17[%c0_32, %c0_33], %32 {strides = array<i32>} : memref<2x128xf32, #tpu.memory_space<vmem>>, vector<2x128xf32>,
    %c0_34 = arith.constant 0 : index
    %c0_35 = arith.constant 0 : index
    %c0_36 = arith.constant 0 : index
    %34 = vector.load %arg11[%c0_34, %c0_35, %c0_36] : memref<2x4x256xf32, #tpu.memory_space<vmem>>, vector<2x4x256xf32>
    %c0_37 = arith.constant 0 : index
    %c0_38 = arith.constant 0 : index
    %c0_39 = arith.constant 0 : index
    %35 = vector.load %arg12[%c0_37, %c0_38, %c0_39] : memref<1x4x1xf32, #tpu.memory_space<vmem>>, vector<1x4x1xf32>
    %36 = vector.broadcast %35 : vector<1x4x1xf32> to vector<2x4x256xf32>
    %37 = arith.mulf %34, %36 : vector<2x4x256xf32>
    %c0_40 = arith.constant 0 : index
    %c0_41 = arith.constant 0 : index
    %c0_42 = arith.constant 0 : index
    %38 = vector.load %arg13[%c0_40, %c0_41, %c0_42] : memref<1x4x1xf32, #tpu.memory_space<vmem>>, vector<1x4x1xf32>
    %39 = vector.broadcast %38 : vector<1x4x1xf32> to vector<2x4x256xf32>
    %40 = arith.addf %37, %39 : vector<2x4x256xf32>
    %cst_43 = arith.constant 0.000000e+00 : f32
    %41 = vector.broadcast %cst_43 : f32 to vector<2x4x256xf32>
    %42 = arith.maximumf %40, %41 : vector<2x4x256xf32>
    %cst_44 = arith.constant dense<0.000000e+00> : vector<2x4xf32>
    %43 = vector.multi_reduction <add>, %42, %cst_44 [2] : vector<2x4x256xf32> to vector<2x4xf32>
    %44 = arith.truncf %43 : vector<2x4xf32> to vector<2x4xbf16>
    %c0_45 = arith.constant 0 : index
    %c0_46 = arith.constant 0 : index
    %45 = vector.load %arg14[%c0_45, %c0_46] : memref<4x128xbf16, #tpu.memory_space<vmem>>, vector<4x128xbf16>
    %cst_47 = arith.constant dense<0.000000e+00> : vector<2x128xf32>
    %46 = tpu.matmul %44, %45, %cst_47 {dimension_numbers = #tpu.dot_dimension_numbers<[1], [0], [0], [1], [0, 0, 1, 1], [], []>} : vector<2x4xbf16>, vector<4x128xbf16>, vector<2x128xf32> -> vector<2x128xf32>
    %c0_48 = arith.constant 0 : index
    %c0_49 = arith.constant 0 : index
    %47 = vector.load %arg15[%c0_48, %c0_49] : memref<1x128xf32, #tpu.memory_space<vmem>>, vector<1x128xf32>
    %48 = vector.broadcast %47 : vector<1x128xf32> to vector<2x128xf32>
    %49 = arith.addf %46, %48 : vector<2x128xf32>
    %c0_50 = arith.constant 0 : index
    %c0_51 = arith.constant 0 : index
    %50 = vector.load %arg18[%c0_50, %c0_51] : memref<2x128xf32, #tpu.memory_space<vmem>>, vector<2x128xf32>
    tpu.vector_store %arg18[%c0_50, %c0_51], %49 {strides = array<i32>} : memref<2x128xf32, #tpu.memory_space<vmem>>, vector<2x128xf32>,
    return
  }
  func.func @transform_0(%arg0: i32) -> (i32, i32, i32) {
    %c0_i32 = arith.constant 0 : i32
    %c0_i32_0 = arith.constant 0 : i32
    %c0_i32_1 = arith.constant 0 : i32
    %c0_i32_2 = arith.constant 0 : i32
    return %c0_i32, %c0_i32_0, %c0_i32_1 : i32, i32, i32
  }
  func.func @transform_1(%arg0: i32) -> (i32, i32, i32) {
    %c0_i32 = arith.constant 0 : i32
    %c0_i32_0 = arith.constant 0 : i32
    %c0_i32_1 = arith.constant 0 : i32
    %c0_i32_2 = arith.constant 0 : i32
    return %c0_i32, %c0_i32_0, %c0_i32_1 : i32, i32, i32
  }
  func.func @transform_2(%arg0: i32) -> (i32, i32, i32) {
    %c0_i32 = arith.constant 0 : i32
    %c0_i32_0 = arith.constant 0 : i32
    %c0_i32_1 = arith.constant 0 : i32
    %c0_i32_2 = arith.constant 0 : i32
    return %c0_i32, %c0_i32_0, %c0_i32_1 : i32, i32, i32
  }
  func.func @transform_3(%arg0: i32) -> (i32, i32) {
    %c0_i32 = arith.constant 0 : i32
    %c0_i32_0 = arith.constant 0 : i32
    return %c0_i32, %arg0 : i32, i32
  }
  func.func @transform_4(%arg0: i32) -> (i32, i32) {
    %c0_i32 = arith.constant 0 : i32
    %c0_i32_0 = arith.constant 0 : i32
    return %c0_i32, %arg0 : i32, i32
  }
  func.func @transform_5(%arg0: i32) -> (i32, i32, i32) {
    %c0_i32 = arith.constant 0 : i32
    %c0_i32_0 = arith.constant 0 : i32
    %c0_i32_1 = arith.constant 0 : i32
    %c0_i32_2 = arith.constant 0 : i32
    return %c0_i32, %c0_i32_0, %c0_i32_1 : i32, i32, i32
  }
  func.func @transform_6(%arg0: i32) -> (i32, i32, i32) {
    %c0_i32 = arith.constant 0 : i32
    %c0_i32_0 = arith.constant 0 : i32
    %c0_i32_1 = arith.constant 0 : i32
    %c0_i32_2 = arith.constant 0 : i32
    return %c0_i32, %c0_i32_0, %c0_i32_1 : i32, i32, i32
  }
  func.func @transform_7(%arg0: i32) -> (i32, i32, i32) {
    %c0_i32 = arith.constant 0 : i32
    %c0_i32_0 = arith.constant 0 : i32
    %c0_i32_1 = arith.constant 0 : i32
    %c0_i32_2 = arith.constant 0 : i32
    return %c0_i32, %c0_i32_0, %c0_i32_1 : i32, i32, i32
  }
  func.func @transform_8(%arg0: i32) -> (i32, i32) {
    %c0_i32 = arith.constant 0 : i32
    %c0_i32_0 = arith.constant 0 : i32
    return %c0_i32, %arg0 : i32, i32
  }
  func.func @transform_9(%arg0: i32) -> (i32, i32) {
    %c0_i32 = arith.constant 0 : i32
    %c0_i32_0 = arith.constant 0 : i32
    return %c0_i32, %arg0 : i32, i32
  }
  func.func @transform_10(%arg0: i32) -> (i32, i32, i32) {
    %c0_i32 = arith.constant 0 : i32
    %c0_i32_0 = arith.constant 0 : i32
    %c0_i32_1 = arith.constant 0 : i32
    %c0_i32_2 = arith.constant 0 : i32
    return %c0_i32, %c0_i32_0, %c0_i32_1 : i32, i32, i32
  }
  func.func @transform_11(%arg0: i32) -> (i32, i32, i32) {
    %c0_i32 = arith.constant 0 : i32
    %c0_i32_0 = arith.constant 0 : i32
    %c0_i32_1 = arith.constant 0 : i32
    %c0_i32_2 = arith.constant 0 : i32
    return %c0_i32, %c0_i32_0, %c0_i32_1 : i32, i32, i32
  }
  func.func @transform_12(%arg0: i32) -> (i32, i32, i32) {
    %c0_i32 = arith.constant 0 : i32
    %c0_i32_0 = arith.constant 0 : i32
    %c0_i32_1 = arith.constant 0 : i32
    %c0_i32_2 = arith.constant 0 : i32
    return %c0_i32, %c0_i32_0, %c0_i32_1 : i32, i32, i32
  }
  func.func @transform_13(%arg0: i32) -> (i32, i32) {
    %c0_i32 = arith.constant 0 : i32
    %c0_i32_0 = arith.constant 0 : i32
    return %c0_i32, %arg0 : i32, i32
  }
  func.func @transform_14(%arg0: i32) -> (i32, i32) {
    %c0_i32 = arith.constant 0 : i32
    %c0_i32_0 = arith.constant 0 : i32
    return %c0_i32, %arg0 : i32, i32
  }
  func.func @transform_15(%arg0: i32) -> (i32, i32) {
    %c0_i32 = arith.constant 0 : i32
    %c0_i32_0 = arith.constant 0 : i32
    return %c0_i32, %arg0 : i32, i32
  }
  func.func @transform_16(%arg0: i32) -> (i32, i32) {
    %c0_i32 = arith.constant 0 : i32
    %c0_i32_0 = arith.constant 0 : i32
    return %c0_i32, %arg0 : i32, i32
  }
  func.func @transform_17(%arg0: i32) -> (i32, i32) {
    %c0_i32 = arith.constant 0 : i32
    %c0_i32_0 = arith.constant 0 : i32
    return %c0_i32, %arg0 : i32, i32
  }
}

</mosaic_0001>

<llo_original>
// kernel: tpu_custom_call.1
$region0: #{tpu_custom_call.1}
  #allocation0 [shape = 'u32[]', space=smem, size = 0x4, offset = 0x4, fixed_abs, tag = 'smem constant byte address 0x4 - core index']
  #allocation1 [shape = 'u32[144,128]{1,0:T(1,128)}', space=vmem, size = 0x12000, scoped, tag = 'internal scratch']
  %s0 = inlined_call_operand.vmem [shape: f32[2,16,16], index: 0, kind: input, shape index: {}]
  %s1 = inlined_call_operand.vmem [shape: f32[1,16,1], index: 1, kind: input, shape index: {}]
  %s2 = inlined_call_operand.vmem [shape: f32[1,16,1], index: 2, kind: input, shape index: {}]
  %s3 = inlined_call_operand.vmem [shape: bf16[16,256], index: 3, kind: input, shape index: {}]
  %s4 = inlined_call_operand.hbm [shape: f32[1,256], index: 4, kind: input, shape index: {}]
  %s5 = inlined_call_operand.vmem [shape: f32[2,8,64], index: 5, kind: input, shape index: {}]
  %s6 = inlined_call_operand.vmem [shape: f32[1,8,1], index: 6, kind: input, shape index: {}]
  %s7 = inlined_call_operand.vmem [shape: f32[1,8,1], index: 7, kind: input, shape index: {}]
  %s8 = inlined_call_operand.vmem [shape: bf16[8,256], index: 8, kind: input, shape index: {}]
  %s9 = inlined_call_operand.vmem [shape: f32[1,256], index: 9, kind: input, shape index: {}]
  %s10 = inlined_call_operand.vmem [shape: f32[2,4,256], index: 10, kind: input, shape index: {}]
  %s11 = inlined_call_operand.vmem [shape: f32[1,4,1], index: 11, kind: input, shape index: {}]
  %s12 = inlined_call_operand.vmem [shape: f32[1,4,1], index: 12, kind: input, shape index: {}]
  %s13 = inlined_call_operand.vmem [shape: bf16[4,256], index: 13, kind: input, shape index: {}]
  %s14 = inlined_call_operand.vmem [shape: f32[1,256], index: 14, kind: input, shape index: {}]
  %s15 = inlined_call_operand.hbm [shape: f32[2,256], index: 15, kind: output, shape index: {0}]
  %s16 = inlined_call_operand.hbm [shape: f32[2,256], index: 16, kind: output, shape index: {1}]
  %s17 = inlined_call_operand.hbm [shape: f32[2,256], index: 17, kind: output, shape index: {2}]
  %18 = xla_tuple %s15, %s16, %s17
  %s19 = sld [smem:[#allocation0]]
  $region154: #{tpu_custom_call.1} parent=0
    _
  %s21 = ssub.s32 1, %s19
  %s22 = scalar_select 0, %s21, %s19
  $region1: #{tpu_custom_call.1} parent=0
    #allocation2 [shape = 'u8[8192]{0}', space=vmem, size = 0x2000, scoped, tag = 'input window, operand 3']
    #allocation3 [shape = 'u8[1024]{0}', space=vmem, size = 0x400, scoped, tag = 'input window, operand 4']
    #allocation4 [shape = 's32[2]{0}', space=sflag, size = 0x8, scoped, tag = 'scoped memory for tpu_custom_call.1']
    #allocation5 [shape = 's32[2]{0}', space=sflag, size = 0x8, scoped, tag = 'scoped memory for tpu_custom_call.1']
    #allocation6 [shape = 'u8[2048]{0}', space=vmem, size = 0x800, scoped, tag = 'output window, operand 0']
    #allocation7 [shape = 'u8[2048]{0}', space=vmem, size = 0x800, scoped, tag = 'output window, operand 1']
    #allocation8 [shape = 's32[2]{0}', space=sflag, size = 0x8, scoped, tag = 'scoped memory for tpu_custom_call.1']
    #allocation9 [shape = 'u8[2048]{0}', space=vmem, size = 0x800, scoped, tag = 'output window, operand 2']
    %23 = vsyncpa [#allocation4], 0
    %s24 = scalar_lea.sflag [#allocation4], 1
    %25 = vsyncpa %s24, 0
    %26 = vsyncpa [#allocation5], 0
    %s27 = scalar_lea.sflag [#allocation5], 1
    %28 = vsyncpa %s27, 0
    %29 = vsyncpa [#allocation8], 0
    %s30 = scalar_lea.sflag [#allocation8], 1
    %31 = vsyncpa %s30, 0
    loop: start=0, step=1, limit=4
    $region2: #{tpu_custom_call.1} parent=1 // loop_pre_header
      _
    $region3: #{tpu_custom_call.1} parent=1 // loop_header
      %s33 = sphi 0, %s37
      %p34 = scmp.ge.s32.totalorder %s33, 4
      %s41 = sphi 0, %s41
      %s43 = sphi 0, %s41
      %s44 = sphi 0, %s43
      %s58 = sphi 0, %s44
      %s62 = sphi 0, %s62
      %s64 = sphi 0, %s62
      %s65 = sphi 0, %s64
      %s79 = sphi 0, %s65
      %s83 = sphi 0, %s83
      %s85 = sphi 0, %s83
      %s86 = sphi 0, %s85
      %s100 = sphi 0, %s86
      %s106 = sphi 0, %s108
      %s109 = sphi 0, %s106
      %s110 = sphi 0, %s109
      %s126 = sphi 0, %s110
      %s132 = sphi 0, %s134
      %s135 = sphi 0, %s132
      %s136 = sphi 0, %s135
      %s152 = sphi 0, %s136
      %s156 = sphi 0, %s156
      %s158 = sphi 0, %s156
      %s159 = sphi 0, %s158
      %s173 = sphi 0, %s159
      %s177 = sphi 0, %s177
      %s179 = sphi 0, %s177
      %s180 = sphi 0, %s179
      %s194 = sphi 0, %s180
      %s198 = sphi 0, %s198
      %s200 = sphi 0, %s198
      %s201 = sphi 0, %s200
      %s215 = sphi 0, %s201
      %s221 = sphi 0, %s223
      %s224 = sphi 0, %s221
      %s225 = sphi 0, %s224
      %s241 = sphi 0, %s225
      %s247 = sphi 0, %s249
      %s250 = sphi 0, %s247
      %s251 = sphi 0, %s250
      %s267 = sphi 0, %s251
      %s271 = sphi 0, %s271
      %s273 = sphi 0, %s271
      %s274 = sphi 0, %s273
      %s288 = sphi 0, %s274
      %s292 = sphi 0, %s292
      %s294 = sphi 0, %s292
      %s295 = sphi 0, %s294
      %s309 = sphi 0, %s295
      %s313 = sphi 0, %s313
      %s315 = sphi 0, %s313
      %s316 = sphi 0, %s315
      %s330 = sphi 0, %s316
      %s336 = sphi 0, %s338
      %s339 = sphi 0, %s336
      %s340 = sphi 0, %s339
      %s356 = sphi 0, %s340
      %s362 = sphi 0, %s364
      %s365 = sphi 0, %s362
      %s366 = sphi 0, %s365
      %s382 = sphi 0, %s366
      %s388 = sphi 0, %s390
      %s391 = sphi 0, %s388
      %s392 = sphi 0, %s391
      %s408 = sphi 0, %s392
      %s414 = sphi 0, %s416
      %s417 = sphi 0, %s414
      %s418 = sphi 0, %s417
      %s434 = sphi 0, %s418
      %s440 = sphi 0, %s442
      %s443 = sphi 0, %s440
      %s444 = sphi 0, %s443
      %s460 = sphi 0, %s444
    $region4: #{tpu_custom_call.1} parent=1 // loop_header_branch
      %36 = sbr.rel (%p34) target = $region8
    $region5: #{tpu_custom_call.1} parent=1 // loop_body
      %s38 = ssub.s32 %s33, 1
      %s39 = ssub.s32 %s33, 2
      %s40 = sadd.s32 %s33, 1
      %s42 = sadd.s32 %s41, 1
      %p45 = scmp.eq.s32.totalorder %s33, 1
      %p46 = scmp.ne.s32.totalorder %s41, %s43
      %p47 = scmp.eq.s32.totalorder %s33, 0
      %p48 = por %p46, %p47
      %p49 = scmp.ne.s32.totalorder %s41, %s43
      %p50 = scmp.eq.s32.totalorder %s38, 1
      %p51 = por %p49, %p50
      %p52 = scmp.ne.s32.totalorder %s43, %s44
      %p53 = scmp.eq.s32.totalorder %s38, 0
      %p54 = por %p52, %p53
      %p55 = scmp.ne.s32.totalorder %s43, %s44
      %p56 = scmp.eq.s32.totalorder %s39, 1
      %p57 = por %p55, %p56
      %p59 = scmp.ne.s32.totalorder %s44, %s58
      %p60 = scmp.eq.s32.totalorder %s39, 0
      %p61 = por %p59, %p60
      %s63 = sadd.s32 %s62, 1
      %p66 = scmp.eq.s32.totalorder %s33, 1
      %p67 = scmp.ne.s32.totalorder %s62, %s64
      %p68 = scmp.eq.s32.totalorder %s33, 0
      %p69 = por %p67, %p68
      %p70 = scmp.ne.s32.totalorder %s62, %s64
      %p71 = scmp.eq.s32.totalorder %s38, 1
      %p72 = por %p70, %p71
      %p73 = scmp.ne.s32.totalorder %s64, %s65
      %p74 = scmp.eq.s32.totalorder %s38, 0
      %p75 = por %p73, %p74
      %p76 = scmp.ne.s32.totalorder %s64, %s65
      %p77 = scmp.eq.s32.totalorder %s39, 1
      %p78 = por %p76, %p77
      %p80 = scmp.ne.s32.totalorder %s65, %s79
      %p81 = scmp.eq.s32.totalorder %s39, 0
      %p82 = por %p80, %p81
      %s84 = sadd.s32 %s83, 1
      %p87 = scmp.eq.s32.totalorder %s33, 1
      %p88 = scmp.ne.s32.totalorder %s83, %s85
      %p89 = scmp.eq.s32.totalorder %s33, 0
      %p90 = por %p88, %p89
      %p91 = scmp.ne.s32.totalorder %s83, %s85
      %p92 = scmp.eq.s32.totalorder %s38, 1
      %p93 = por %p91, %p92
      %p94 = scmp.ne.s32.totalorder %s85, %s86
      %p95 = scmp.eq.s32.totalorder %s38, 0
      %p96 = por %p94, %p95
      %p97 = scmp.ne.s32.totalorder %s85, %s86
      %p98 = scmp.eq.s32.totalorder %s39, 1
      %p99 = por %p97, %p98
      %p101 = scmp.ne.s32.totalorder %s86, %s100
      %p102 = scmp.eq.s32.totalorder %s39, 0
      %p103 = por %p101, %p102
      %s104 = ssub.s32 %s33, %s40
      %p105 = scmp.eq.s32.totalorder %s104, 0
      %s107 = sadd.s32 %s106, 1
      %s108 = scalar_select %p105, %s106, %s107
      %p111 = pneg %p105
      %p112 = scmp.eq.s32.totalorder %s33, 1
      %p113 = por %p111, %p112
      %p114 = scmp.ne.s32.totalorder %s106, %s109
      %p115 = scmp.eq.s32.totalorder %s33, 0
      %p116 = por %p114, %p115
      %p117 = scmp.ne.s32.totalorder %s106, %s109
      %p118 = scmp.eq.s32.totalorder %s38, 1
      %p119 = por %p117, %p118
      %p120 = scmp.ne.s32.totalorder %s109, %s110
      %p121 = scmp.eq.s32.totalorder %s38, 0
      %p122 = por %p120, %p121
      %p123 = scmp.ne.s32.totalorder %s109, %s110
      %p124 = scmp.eq.s32.totalorder %s39, 1
      %p125 = por %p123, %p124
      %p127 = scmp.ne.s32.totalorder %s110, %s126
      %p128 = scmp.eq.s32.totalorder %s39, 0
      %p129 = por %p127, %p128
      %s130 = ssub.s32 %s33, %s40
      %p131 = scmp.eq.s32.totalorder %s130, 0
      %s133 = sadd.s32 %s132, 1
      %s134 = scalar_select %p131, %s132, %s133
      %p137 = pneg %p131
      %p138 = scmp.eq.s32.totalorder %s33, 1
      %p139 = por %p137, %p138
      %p140 = scmp.ne.s32.totalorder %s132, %s135
      %p141 = scmp.eq.s32.totalorder %s33, 0
      %p142 = por %p140, %p141
      %p143 = scmp.ne.s32.totalorder %s132, %s135
      %p144 = scmp.eq.s32.totalorder %s38, 1
      %p145 = por %p143, %p144
      %p146 = scmp.ne.s32.totalorder %s135, %s136
      %p147 = scmp.eq.s32.totalorder %s38, 0
      %p148 = por %p146, %p147
      %p149 = scmp.ne.s32.totalorder %s135, %s136
      %p150 = scmp.eq.s32.totalorder %s39, 1
      %p151 = por %p149, %p150
      %p153 = scmp.ne.s32.totalorder %s136, %s152
      %p154 = scmp.eq.s32.totalorder %s39, 0
      %p155 = por %p153, %p154
      %s157 = sadd.s32 %s156, 1
      %p160 = scmp.eq.s32.totalorder %s33, 1
      %p161 = scmp.ne.s32.totalorder %s156, %s158
      %p162 = scmp.eq.s32.totalorder %s33, 0
      %p163 = por %p161, %p162
      %p164 = scmp.ne.s32.totalorder %s156, %s158
      %p165 = scmp.eq.s32.totalorder %s38, 1
      %p166 = por %p164, %p165
      %p167 = scmp.ne.s32.totalorder %s158, %s159
      %p168 = scmp.eq.s32.totalorder %s38, 0
      %p169 = por %p167, %p168
      %p170 = scmp.ne.s32.totalorder %s158, %s159
      %p171 = scmp.eq.s32.totalorder %s39, 1
      %p172 = por %p170, %p171
      %p174 = scmp.ne.s32.totalorder %s159, %s173
      %p175 = scmp.eq.s32.totalorder %s39, 0
      %p176 = por %p174, %p175
      %s178 = sadd.s32 %s177, 1
      %p181 = scmp.eq.s32.totalorder %s33, 1
      %p182 = scmp.ne.s32.totalorder %s177, %s179
      %p183 = scmp.eq.s32.totalorder %s33, 0
      %p184 = por %p182, %p183
      %p185 = scmp.ne.s32.totalorder %s177, %s179
      %p186 = scmp.eq.s32.totalorder %s38, 1
      %p187 = por %p185, %p186
      %p188 = scmp.ne.s32.totalorder %s179, %s180
      %p189 = scmp.eq.s32.totalorder %s38, 0
      %p190 = por %p188, %p189
      %p191 = scmp.ne.s32.totalorder %s179, %s180
      %p192 = scmp.eq.s32.totalorder %s39, 1
      %p193 = por %p191, %p192
      %p195 = scmp.ne.s32.totalorder %s180, %s194
      %p196 = scmp.eq.s32.totalorder %s39, 0
      %p197 = por %p195, %p196
      %s199 = sadd.s32 %s198, 1
      %p202 = scmp.eq.s32.totalorder %s33, 1
      %p203 = scmp.ne.s32.totalorder %s198, %s200
      %p204 = scmp.eq.s32.totalorder %s33, 0
      %p205 = por %p203, %p204
      %p206 = scmp.ne.s32.totalorder %s198, %s200
      %p207 = scmp.eq.s32.totalorder %s38, 1
      %p208 = por %p206, %p207
      %p209 = scmp.ne.s32.totalorder %s200, %s201
      %p210 = scmp.eq.s32.totalorder %s38, 0
      %p211 = por %p209, %p210
      %p212 = scmp.ne.s32.totalorder %s200, %s201
      %p213 = scmp.eq.s32.totalorder %s39, 1
      %p214 = por %p212, %p213
      %p216 = scmp.ne.s32.totalorder %s201, %s215
      %p217 = scmp.eq.s32.totalorder %s39, 0
      %p218 = por %p216, %p217
      %s219 = ssub.s32 %s33, %s40
      %p220 = scmp.eq.s32.totalorder %s219, 0
      %s222 = sadd.s32 %s221, 1
      %s223 = scalar_select %p220, %s221, %s222
      %p226 = pneg %p220
      %p227 = scmp.eq.s32.totalorder %s33, 1
      %p228 = por %p226, %p227
      %p229 = scmp.ne.s32.totalorder %s221, %s224
      %p230 = scmp.eq.s32.totalorder %s33, 0
      %p231 = por %p229, %p230
      %p232 = scmp.ne.s32.totalorder %s221, %s224
      %p233 = scmp.eq.s32.totalorder %s38, 1
      %p234 = por %p232, %p233
      %p235 = scmp.ne.s32.totalorder %s224, %s225
      %p236 = scmp.eq.s32.totalorder %s38, 0
      %p237 = por %p235, %p236
      %p238 = scmp.ne.s32.totalorder %s224, %s225
      %p239 = scmp.eq.s32.totalorder %s39, 1
      %p240 = por %p238, %p239
      %p242 = scmp.ne.s32.totalorder %s225, %s241
      %p243 = scmp.eq.s32.totalorder %s39, 0
      %p244 = por %p242, %p243
      %s245 = ssub.s32 %s33, %s40
      %p246 = scmp.eq.s32.totalorder %s245, 0
      %s248 = sadd.s32 %s247, 1
      %s249 = scalar_select %p246, %s247, %s248
      %p252 = pneg %p246
      %p253 = scmp.eq.s32.totalorder %s33, 1
      %p254 = por %p252, %p253
      %p255 = scmp.ne.s32.totalorder %s247, %s250
      %p256 = scmp.eq.s32.totalorder %s33, 0
      %p257 = por %p255, %p256
      %p258 = scmp.ne.s32.totalorder %s247, %s250
      %p259 = scmp.eq.s32.totalorder %s38, 1
      %p260 = por %p258, %p259
      %p261 = scmp.ne.s32.totalorder %s250, %s251
      %p262 = scmp.eq.s32.totalorder %s38, 0
      %p263 = por %p261, %p262
      %p264 = scmp.ne.s32.totalorder %s250, %s251
      %p265 = scmp.eq.s32.totalorder %s39, 1
      %p266 = por %p264, %p265
      %p268 = scmp.ne.s32.totalorder %s251, %s267
      %p269 = scmp.eq.s32.totalorder %s39, 0
      %p270 = por %p268, %p269
      %s272 = sadd.s32 %s271, 1
      %p275 = scmp.eq.s32.totalorder %s33, 1
      %p276 = scmp.ne.s32.totalorder %s271, %s273
      %p277 = scmp.eq.s32.totalorder %s33, 0
      %p278 = por %p276, %p277
      %p279 = scmp.ne.s32.totalorder %s271, %s273
      %p280 = scmp.eq.s32.totalorder %s38, 1
      %p281 = por %p279, %p280
      %p282 = scmp.ne.s32.totalorder %s273, %s274
      %p283 = scmp.eq.s32.totalorder %s38, 0
      %p284 = por %p282, %p283
      %p285 = scmp.ne.s32.totalorder %s273, %s274
      %p286 = scmp.eq.s32.totalorder %s39, 1
      %p287 = por %p285, %p286
      %p289 = scmp.ne.s32.totalorder %s274, %s288
      %p290 = scmp.eq.s32.totalorder %s39, 0
      %p291 = por %p289, %p290
      %s293 = sadd.s32 %s292, 1
      %p296 = scmp.eq.s32.totalorder %s33, 1
      %p297 = scmp.ne.s32.totalorder %s292, %s294
      %p298 = scmp.eq.s32.totalorder %s33, 0
      %p299 = por %p297, %p298
      %p300 = scmp.ne.s32.totalorder %s292, %s294
      %p301 = scmp.eq.s32.totalorder %s38, 1
      %p302 = por %p300, %p301
      %p303 = scmp.ne.s32.totalorder %s294, %s295
      %p304 = scmp.eq.s32.totalorder %s38, 0
      %p305 = por %p303, %p304
      %p306 = scmp.ne.s32.totalorder %s294, %s295
      %p307 = scmp.eq.s32.totalorder %s39, 1
      %p308 = por %p306, %p307
      %p310 = scmp.ne.s32.totalorder %s295, %s309
      %p311 = scmp.eq.s32.totalorder %s39, 0
      %p312 = por %p310, %p311
      %s314 = sadd.s32 %s313, 1
      %p317 = scmp.eq.s32.totalorder %s33, 1
      %p318 = scmp.ne.s32.totalorder %s313, %s315
      %p319 = scmp.eq.s32.totalorder %s33, 0
      %p320 = por %p318, %p319
      %p321 = scmp.ne.s32.totalorder %s313, %s315
      %p322 = scmp.eq.s32.totalorder %s38, 1
      %p323 = por %p321, %p322
      %p324 = scmp.ne.s32.totalorder %s315, %s316
      %p325 = scmp.eq.s32.totalorder %s38, 0
      %p326 = por %p324, %p325
      %p327 = scmp.ne.s32.totalorder %s315, %s316
      %p328 = scmp.eq.s32.totalorder %s39, 1
      %p329 = por %p327, %p328
      %p331 = scmp.ne.s32.totalorder %s316, %s330
      %p332 = scmp.eq.s32.totalorder %s39, 0
      %p333 = por %p331, %p332
      %s334 = ssub.s32 %s33, %s40
      %p335 = scmp.eq.s32.totalorder %s334, 0
      %s337 = sadd.s32 %s336, 1
      %s338 = scalar_select %p335, %s336, %s337
      %p341 = pneg %p335
      %p342 = scmp.eq.s32.totalorder %s33, 1
      %p343 = por %p341, %p342
      %p344 = scmp.ne.s32.totalorder %s336, %s339
      %p345 = scmp.eq.s32.totalorder %s33, 0
      %p346 = por %p344, %p345
      %p347 = scmp.ne.s32.totalorder %s336, %s339
      %p348 = scmp.eq.s32.totalorder %s38, 1
      %p349 = por %p347, %p348
      %p350 = scmp.ne.s32.totalorder %s339, %s340
      %p351 = scmp.eq.s32.totalorder %s38, 0
      %p352 = por %p350, %p351
      %p353 = scmp.ne.s32.totalorder %s339, %s340
      %p354 = scmp.eq.s32.totalorder %s39, 1
      %p355 = por %p353, %p354
      %p357 = scmp.ne.s32.totalorder %s340, %s356
      %p358 = scmp.eq.s32.totalorder %s39, 0
      %p359 = por %p357, %p358
      %s360 = ssub.s32 %s33, %s40
      %p361 = scmp.eq.s32.totalorder %s360, 0
      %s363 = sadd.s32 %s362, 1
      %s364 = scalar_select %p361, %s362, %s363
      %p367 = pneg %p361
      %p368 = scmp.eq.s32.totalorder %s33, 1
      %p369 = por %p367, %p368
      %p370 = scmp.ne.s32.totalorder %s362, %s365
      %p371 = scmp.eq.s32.totalorder %s33, 0
      %p372 = por %p370, %p371
      %p373 = scmp.ne.s32.totalorder %s362, %s365
      %p374 = scmp.eq.s32.totalorder %s38, 1
      %p375 = por %p373, %p374
      %p376 = scmp.ne.s32.totalorder %s365, %s366
      %p377 = scmp.eq.s32.totalorder %s38, 0
      %p378 = por %p376, %p377
      %p379 = scmp.ne.s32.totalorder %s365, %s366
      %p380 = scmp.eq.s32.totalorder %s39, 1
      %p381 = por %p379, %p380
      %p383 = scmp.ne.s32.totalorder %s366, %s382
      %p384 = scmp.eq.s32.totalorder %s39, 0
      %p385 = por %p383, %p384
      %s386 = ssub.s32 %s33, %s40
      %p387 = scmp.eq.s32.totalorder %s386, 0
      %s389 = sadd.s32 %s388, 1
      %s390 = scalar_select %p387, %s388, %s389
      %p393 = pneg %p387
      %p394 = scmp.eq.s32.totalorder %s33, 1
      %p395 = por %p393, %p394
      %p396 = scmp.ne.s32.totalorder %s388, %s391
      %p397 = scmp.eq.s32.totalorder %s33, 0
      %p398 = por %p396, %p397
      %p399 = scmp.ne.s32.totalorder %s388, %s391
      %p400 = scmp.eq.s32.totalorder %s38, 1
      %p401 = por %p399, %p400
      %p402 = scmp.ne.s32.totalorder %s391, %s392
      %p403 = scmp.eq.s32.totalorder %s38, 0
      %p404 = por %p402, %p403
      %p405 = scmp.ne.s32.totalorder %s391, %s392
      %p406 = scmp.eq.s32.totalorder %s39, 1
      %p407 = por %p405, %p406
      %p409 = scmp.ne.s32.totalorder %s392, %s408
      %p410 = scmp.eq.s32.totalorder %s39, 0
      %p411 = por %p409, %p410
      %s412 = ssub.s32 %s33, %s40
      %p413 = scmp.eq.s32.totalorder %s412, 0
      %s415 = sadd.s32 %s414, 1
      %s416 = scalar_select %p413, %s414, %s415
      %p419 = pneg %p413
      %p420 = scmp.eq.s32.totalorder %s33, 1
      %p421 = por %p419, %p420
      %p422 = scmp.ne.s32.totalorder %s414, %s417
      %p423 = scmp.eq.s32.totalorder %s33, 0
      %p424 = por %p422, %p423
      %p425 = scmp.ne.s32.totalorder %s414, %s417
      %p426 = scmp.eq.s32.totalorder %s38, 1
      %p427 = por %p425, %p426
      %p428 = scmp.ne.s32.totalorder %s417, %s418
      %p429 = scmp.eq.s32.totalorder %s38, 0
      %p430 = por %p428, %p429
      %p431 = scmp.ne.s32.totalorder %s417, %s418
      %p432 = scmp.eq.s32.totalorder %s39, 1
      %p433 = por %p431, %p432
      %p435 = scmp.ne.s32.totalorder %s418, %s434
      %p436 = scmp.eq.s32.totalorder %s39, 0
      %p437 = por %p435, %p436
      %s438 = ssub.s32 %s33, %s40
      %p439 = scmp.eq.s32.totalorder %s438, 0
      %s441 = sadd.s32 %s440, 1
      %s442 = scalar_select %p439, %s440, %s441
      %p445 = pneg %p439
      %p446 = scmp.eq.s32.totalorder %s33, 1
      %p447 = por %p445, %p446
      %p448 = scmp.ne.s32.totalorder %s440, %s443
      %p449 = scmp.eq.s32.totalorder %s33, 0
      %p450 = por %p448, %p449
      %p451 = scmp.ne.s32.totalorder %s440, %s443
      %p452 = scmp.eq.s32.totalorder %s38, 1
      %p453 = por %p451, %p452
      %p454 = scmp.ne.s32.totalorder %s443, %s444
      %p455 = scmp.eq.s32.totalorder %s38, 0
      %p456 = por %p454, %p455
      %p457 = scmp.ne.s32.totalorder %s443, %s444
      %p458 = scmp.eq.s32.totalorder %s39, 1
      %p459 = por %p457, %p458
      %p461 = scmp.ne.s32.totalorder %s444, %s460
      %p462 = scmp.eq.s32.totalorder %s39, 0
      %p463 = por %p461, %p462
      %p464 = scmp.le.s32.totalorder 1, %s33
      %p465 = scmp.lt.s32.totalorder %s33, 3
      %p466 = pnand %p464, %p465
      %p467 = pneg %p466
      // Predicated region
      $region9: #{tpu_custom_call.1} parent=5 // pred_check
        _
      $region10: #{tpu_custom_call.1} parent=5 // pred_check_branch
        %469 = sbr.rel (%p466) target = $region12
      $region11: #{tpu_custom_call.1} parent=5 // pred_region
        %s470 = ssub.s32 %s33, 1
        // Predicated region
        $region13: #{tpu_custom_call.1} parent=11 // pred_check
          %p471 = pneg %p54
        $region14: #{tpu_custom_call.1} parent=11 // pred_check_branch
          %473 = sbr.rel (%p471) target = $region16
        $region15: #{tpu_custom_call.1} parent=11 // pred_region
          _
        $region16: #{tpu_custom_call.1} parent=11 // pred_fallthru
          _
        // Predicated region
        $region17: #{tpu_custom_call.1} parent=11 // pred_check
          %p474 = pneg %p75
        $region18: #{tpu_custom_call.1} parent=11 // pred_check_branch
          %476 = sbr.rel (%p474) target = $region20
        $region19: #{tpu_custom_call.1} parent=11 // pred_region
          _
        $region20: #{tpu_custom_call.1} parent=11 // pred_fallthru
          _
        // Predicated region
        $region21: #{tpu_custom_call.1} parent=11 // pred_check
          %p477 = pneg %p96
        $region22: #{tpu_custom_call.1} parent=11 // pred_check_branch
          %479 = sbr.rel (%p477) target = $region24
        $region23: #{tpu_custom_call.1} parent=11 // pred_region
          _
        $region24: #{tpu_custom_call.1} parent=11 // pred_fallthru
          _
        // Predicated region
        $region25: #{tpu_custom_call.1} parent=11 // pred_check
          %p480 = pneg %p169
        $region26: #{tpu_custom_call.1} parent=11 // pred_check_branch
          %482 = sbr.rel (%p480) target = $region28
        $region27: #{tpu_custom_call.1} parent=11 // pred_region
          _
        $region28: #{tpu_custom_call.1} parent=11 // pred_fallthru
          _
        // Predicated region
        $region29: #{tpu_custom_call.1} parent=11 // pred_check
          %p483 = pneg %p190
        $region30: #{tpu_custom_call.1} parent=11 // pred_check_branch
          %485 = sbr.rel (%p483) target = $region32
        $region31: #{tpu_custom_call.1} parent=11 // pred_region
          _
        $region32: #{tpu_custom_call.1} parent=11 // pred_fallthru
          _
        // Predicated region
        $region33: #{tpu_custom_call.1} parent=11 // pred_check
          %p486 = pneg %p211
        $region34: #{tpu_custom_call.1} parent=11 // pred_check_branch
          %488 = sbr.rel (%p486) target = $region36
        $region35: #{tpu_custom_call.1} parent=11 // pred_region
          _
        $region36: #{tpu_custom_call.1} parent=11 // pred_fallthru
          _
        // Predicated region
        $region37: #{tpu_custom_call.1} parent=11 // pred_check
          %p489 = pneg %p284
        $region38: #{tpu_custom_call.1} parent=11 // pred_check_branch
          %491 = sbr.rel (%p489) target = $region40
        $region39: #{tpu_custom_call.1} parent=11 // pred_region
          _
        $region40: #{tpu_custom_call.1} parent=11 // pred_fallthru
          _
        // Predicated region
        $region41: #{tpu_custom_call.1} parent=11 // pred_check
          %p492 = pneg %p305
        $region42: #{tpu_custom_call.1} parent=11 // pred_check_branch
          %494 = sbr.rel (%p492) target = $region44
        $region43: #{tpu_custom_call.1} parent=11 // pred_region
          _
        $region44: #{tpu_custom_call.1} parent=11 // pred_fallthru
          _
        // Predicated region
        $region45: #{tpu_custom_call.1} parent=11 // pred_check
          %p495 = pneg %p326
        $region46: #{tpu_custom_call.1} parent=11 // pred_check_branch
          %497 = sbr.rel (%p495) target = $region48
        $region47: #{tpu_custom_call.1} parent=11 // pred_region
          _
        $region48: #{tpu_custom_call.1} parent=11 // pred_fallthru
          _
      $region12: #{tpu_custom_call.1} parent=5 // pred_fallthru
        _
      %p498 = scmp.lt.s32.totalorder %s33, 2
      // Predicated region
      $region49: #{tpu_custom_call.1} parent=5 // pred_check
        %p499 = pneg %p498
      $region50: #{tpu_custom_call.1} parent=5 // pred_check_branch
        %501 = sbr.rel (%p499) target = $region52
      $region51: #{tpu_custom_call.1} parent=5 // pred_region
        // Predicated region
        $region53: #{tpu_custom_call.1} parent=51 // pred_check
          %p502 = pneg %p116
        $region54: #{tpu_custom_call.1} parent=51 // pred_check_branch
          %504 = sbr.rel (%p502) target = $region56
        $region55: #{tpu_custom_call.1} parent=51 // pred_region
          %s505 = sand.u32 %s106, 1
          %s506 = sand.u32 %s106, 1
          %s507 = smul.addr %s506, 8
          %s508 = scalar_lea.vmem [#allocation2], %s507
          %s509 = smul.addr %s33, 4
          %s510 = scalar_lea.vmem %s3, %s509
          // Predicated region
          $region57: #{tpu_custom_call.1} parent=55 // pred_check
            _
          $region58: #{tpu_custom_call.1} parent=55 // pred_check_branch
            %512 = sbr.rel (0) target = $region60
          $region59: #{tpu_custom_call.1} parent=55 // pred_region
            // Predicated region
            $region61: #{tpu_custom_call.1} parent=59 // pred_check
              _
            $region62: #{tpu_custom_call.1} parent=59 // pred_check_branch
              %514 = sbr.rel target = $region64
            $region63: #{tpu_custom_call.1} parent=59 // pred_region
              // Predicated region
              $region76: #{tpu_custom_call.1} parent=63 // pred_check
                _
              $region77: #{tpu_custom_call.1} parent=63 // pred_check_branch
                %531 = sbr.rel (0) target = $region79
              $region78: #{tpu_custom_call.1} parent=63 // pred_region
                loop: start=0, step=1, limit=1
                $region80: #{tpu_custom_call.1} parent=78 // loop_pre_header
                  _
                $region81: #{tpu_custom_call.1} parent=78 // loop_header
                  %s533 = sphi 0, %s537
                  %p534 = scmp.ge.s32.totalorder %s533, 1
                  %s538 = sphi %s510, %s510
                  %s539 = sphi %s508, %s508
                $region82: #{tpu_custom_call.1} parent=78 // loop_header_branch
                  %536 = sbr.rel (%p534) target = $region86
                $region83: #{tpu_custom_call.1} parent=78 // loop_body
                  _
                $region84: #{tpu_custom_call.1} parent=78 // loop_footer
                  %s537 = sadd.s32 1, %s533
                $region85: #{tpu_custom_call.1} parent=78 // loop_footer_branch
                  %532 = sbr.rel target = $region81
                $region86: #{tpu_custom_call.1} parent=78 // loop_exit
                  _
                loop: start=0, step=1, limit=1
                $region87: #{tpu_custom_call.1} parent=78 // loop_pre_header
                  _
                $region88: #{tpu_custom_call.1} parent=78 // loop_header
                  %s542 = sphi 0, %s546
                  %p543 = scmp.ge.s32.totalorder %s542, 1
                  %s547 = sphi %s510, %s510
                  %s548 = sphi %s508, %s508
                $region89: #{tpu_custom_call.1} parent=78 // loop_header_branch
                  %545 = sbr.rel (%p543) target = $region93
                $region90: #{tpu_custom_call.1} parent=78 // loop_body
                  %v549 = vld [vmem:[%s547] sm:$0xf]
                  %550 = vst [vmem:[%s548] sm:$0xf] %v549
                  %v551 = vld [vmem:[%s547 + $0x8] sm:$0xf]
                  %552 = vst [vmem:[%s548 + $0x4] sm:$0xf] %v551
                $region91: #{tpu_custom_call.1} parent=78 // loop_footer
                  %s546 = sadd.s32 1, %s542
                $region92: #{tpu_custom_call.1} parent=78 // loop_footer_branch
                  %541 = sbr.rel target = $region88
                $region93: #{tpu_custom_call.1} parent=78 // loop_exit
                  _
              $region79: #{tpu_custom_call.1} parent=63 // pred_fallthru
                _
            $region64: #{tpu_custom_call.1} parent=59 // pred_fallthru
              _
            // Predicated region
            $region65: #{tpu_custom_call.1} parent=59 // pred_check
              _
            $region66: #{tpu_custom_call.1} parent=59 // pred_check_branch
              %516 = sbr.rel (0) target = $region68
            $region67: #{tpu_custom_call.1} parent=59 // pred_region
              loop: start=0, step=1, limit=1
              $region69: #{tpu_custom_call.1} parent=67 // loop_pre_header
                _
              $region70: #{tpu_custom_call.1} parent=67 // loop_header
                %s519 = sphi 0, %s523
                %p520 = scmp.ge.s32.totalorder %s519, 1
                %s524 = sphi %s510, %s510
                %s525 = sphi %s508, %s508
              $region71: #{tpu_custom_call.1} parent=67 // loop_header_branch
                %522 = sbr.rel (%p520) target = $region75
              $region72: #{tpu_custom_call.1} parent=67 // loop_body
                %v526 = vld [vmem:[%s524] sm:$0xf]
                %527 = vst [vmem:[%s525] sm:$0xf] %v526
                %v528 = vld [vmem:[%s524 + $0x8] sm:$0xf]
                %529 = vst [vmem:[%s525 + $0x4] sm:$0xf] %v528
              $region73: #{tpu_custom_call.1} parent=67 // loop_footer
                %s523 = sadd.s32 1, %s519
              $region74: #{tpu_custom_call.1} parent=67 // loop_footer_branch
                %518 = sbr.rel target = $region70
              $region75: #{tpu_custom_call.1} parent=67 // loop_exit
                _
            $region68: #{tpu_custom_call.1} parent=59 // pred_fallthru
              _
          $region60: #{tpu_custom_call.1} parent=55 // pred_fallthru
            _
          %553 = vnop
        $region56: #{tpu_custom_call.1} parent=51 // pred_fallthru
          _
        // Predicated region
        $region94: #{tpu_custom_call.1} parent=51 // pred_check
          %p554 = pneg %p142
        $region95: #{tpu_custom_call.1} parent=51 // pred_check_branch
          %556 = sbr.rel (%p554) target = $region97
        $region96: #{tpu_custom_call.1} parent=51 // pred_region
          %s557 = sand.u32 %s132, 1
          %s558 = scalar_lea.sflag [#allocation4], %s557
          %s559 = sand.u32 %s132, 1
          %s560 = scalar_lea.vmem [#allocation3], %s559
          %s562 = ssub.s32 16, 16
          %563 = vsyncadd %s558, %s562
          %s564 = smul.addr %s33, 16
          %s565 = scalar_lea.hbm %s4, %s564
          %s567 = sshll.u32 %s560, 4
          %s568 = int_to_ptr.vmem [resolvable:$true] %s567
          %570 = dma.hbm_to_vmem [thread:$0]  %s565, 16, %s568, %s558
        $region97: #{tpu_custom_call.1} parent=51 // pred_fallthru
          _
        // Predicated region
        $region98: #{tpu_custom_call.1} parent=51 // pred_check
          %p571 = pneg %p231
        $region99: #{tpu_custom_call.1} parent=51 // pred_check_branch
          %573 = sbr.rel (%p571) target = $region101
        $region100: #{tpu_custom_call.1} parent=51 // pred_region
          %p574 = scmp.lt.s32.totalorder %s33, 1
          %s575 = scalar_select %p574, %s33, 1
          %s576 = smul.addr %s575, 4
          %s577 = scalar_lea.vmem %s8, %s576
        $region101: #{tpu_custom_call.1} parent=51 // pred_fallthru
          _
        // Predicated region
        $region102: #{tpu_custom_call.1} parent=51 // pred_check
          %p578 = pneg %p257
        $region103: #{tpu_custom_call.1} parent=51 // pred_check_branch
          %580 = sbr.rel (%p578) target = $region105
        $region104: #{tpu_custom_call.1} parent=51 // pred_region
          %p581 = scmp.lt.s32.totalorder %s33, 1
          %s582 = scalar_select %p581, %s33, 1
          %s583 = scalar_lea.vmem %s9, %s582
        $region105: #{tpu_custom_call.1} parent=51 // pred_fallthru
          _
        // Predicated region
        $region106: #{tpu_custom_call.1} parent=51 // pred_check
          %p584 = pneg %p346
        $region107: #{tpu_custom_call.1} parent=51 // pred_check_branch
          %586 = sbr.rel (%p584) target = $region109
        $region108: #{tpu_custom_call.1} parent=51 // pred_region
          %p587 = scmp.lt.s32.totalorder %s33, 1
          %s588 = scalar_select %p587, %s33, 1
          %s589 = smul.addr %s588, 2
          %s590 = scalar_lea.vmem %s13, %s589
        $region109: #{tpu_custom_call.1} parent=51 // pred_fallthru
          _
        // Predicated region
        $region110: #{tpu_custom_call.1} parent=51 // pred_check
          %p591 = pneg %p372
        $region111: #{tpu_custom_call.1} parent=51 // pred_check_branch
          %593 = sbr.rel (%p591) target = $region113
        $region112: #{tpu_custom_call.1} parent=51 // pred_region
          %p594 = scmp.lt.s32.totalorder %s33, 1
          %s595 = scalar_select %p594, %s33, 1
          %s596 = scalar_lea.vmem %s14, %s595
        $region113: #{tpu_custom_call.1} parent=51 // pred_fallthru
          _
      $region52: #{tpu_custom_call.1} parent=5 // pred_fallthru
        _
      %p597 = scmp.le.s32.totalorder 1, %s33
      %p598 = scmp.lt.s32.totalorder %s33, 3
      %p599 = pnand %p597, %p598
      %p600 = pneg %p599
      // Predicated region
      $region114: #{tpu_custom_call.1} parent=5 // pred_check
        _
      $region115: #{tpu_custom_call.1} parent=5 // pred_check_branch
        %602 = sbr.rel (%p599) target = $region117
      $region116: #{tpu_custom_call.1} parent=5 // pred_region
        %s603 = ssub.s32 %s33, 1
        %s604 = sand.u32 %s109, 1
        %s605 = sand.u32 %s109, 1
        %s606 = smul.addr %s605, 8
        %s607 = scalar_lea.vmem [#allocation2], %s606
        // Predicated region
        $region118: #{tpu_custom_call.1} parent=116 // pred_check
          %p608 = pneg %p122
        $region119: #{tpu_custom_call.1} parent=116 // pred_check_branch
          %610 = sbr.rel (%p608) target = $region121
        $region120: #{tpu_custom_call.1} parent=116 // pred_region
          _
        $region121: #{tpu_custom_call.1} parent=116 // pred_fallthru
          _
        %s611 = sand.u32 %s135, 1
        %s612 = scalar_lea.sflag [#allocation4], %s611
        %s613 = sand.u32 %s135, 1
        %s614 = scalar_lea.vmem [#allocation3], %s613
        // Predicated region
        $region122: #{tpu_custom_call.1} parent=116 // pred_check
          %p615 = pneg %p148
        $region123: #{tpu_custom_call.1} parent=116 // pred_check_branch
          %617 = sbr.rel (%p615) target = $region125
        $region124: #{tpu_custom_call.1} parent=116 // pred_region
          %618 = dma.done %s612, 16
        $region125: #{tpu_custom_call.1} parent=116 // pred_fallthru
          _
        %p619 = pneg %p54
        %p620 = pneg %p51
        %p621 = pneg %p75
        %p622 = pneg %p72
        %p623 = pneg %p96
        %p624 = pneg %p93
        %s625 = sand.u32 %s109, 1
        %s626 = sand.u32 %s109, 1
        %s627 = smul.addr %s626, 8
        %s628 = scalar_lea.vmem [#allocation2], %s627
        %p629 = pneg %p122
        %p630 = pneg %p119
        %s631 = sand.u32 %s135, 1
        %s632 = scalar_lea.sflag [#allocation4], %s631
        %s633 = sand.u32 %s135, 1
        %s634 = scalar_lea.vmem [#allocation3], %s633
        %p635 = pneg %p148
        %p636 = pneg %p145
        %p637 = pneg %p169
        %p638 = pneg %p166
        %p639 = pneg %p190
        %p640 = pneg %p187
        %p641 = pneg %p211
        %p642 = pneg %p208
        %p643 = scmp.lt.s32.totalorder %s38, 1
        %s644 = scalar_select %p643, %s38, 1
        %s645 = smul.addr %s644, 4
        %s646 = scalar_lea.vmem %s8, %s645
        %p647 = pneg %p237
        %p648 = pneg %p234
        %p649 = scmp.lt.s32.totalorder %s38, 1
        %s650 = scalar_select %p649, %s38, 1
        %s651 = scalar_lea.vmem %s9, %s650
        %p652 = pneg %p263
        %p653 = pneg %p260
        %p654 = pneg %p284
        %p655 = pneg %p281
        %p656 = pneg %p305
        %p657 = pneg %p302
        %p658 = pneg %p326
        %p659 = pneg %p323
        %p660 = scmp.lt.s32.totalorder %s38, 1
        %s661 = scalar_select %p660, %s38, 1
        %s662 = smul.addr %s661, 2
        %s663 = scalar_lea.vmem %s13, %s662
        %p664 = pneg %p352
        %p665 = pneg %p349
        %p666 = scmp.lt.s32.totalorder %s38, 1
        %s667 = scalar_select %p666, %s38, 1
        %s668 = scalar_lea.vmem %s14, %s667
        %p669 = pneg %p378
        %p670 = pneg %p375
        %p671 = pneg %p404
        %p672 = pneg %p401
        %s673 = sand.u32 %s391, 1
        %s674 = scalar_lea.sflag [#allocation5], %s673
        %s675 = sand.u32 %s391, 1
        %s676 = smul.addr %s675, 2
        %s677 = scalar_lea.vmem [#allocation6], %s676
        %p678 = pneg %p430
        %p679 = pneg %p427
        %s680 = sand.u32 %s38, 1
        %s681 = scalar_lea.sflag [#allocation8], %s680
        %s682 = sand.u32 %s417, 1
        %s683 = smul.addr %s682, 2
        %s684 = scalar_lea.vmem [#allocation7], %s683
        %p685 = pneg %p456
        %p686 = pneg %p453
        %s687 = sand.u32 %s38, 1
        %s688 = scalar_lea.sflag [#allocation8], %s687
        %s689 = sand.u32 %s443, 1
        %s690 = smul.addr %s689, 2
        %s691 = scalar_lea.vmem [#allocation9], %s690
        %p692 = scmp.lt.s32.totalorder %s38, 1
        %s693 = scalar_select %p692, %s38, 1
        %s694 = smul.addr %s693, 4
        %s695 = scalar_lea.vmem %s8, %s694
        %p696 = scmp.lt.s32.totalorder %s38, 1
        %s697 = scalar_select %p696, %s38, 1
        %s698 = scalar_lea.vmem %s9, %s697
        %p699 = scmp.lt.s32.totalorder %s38, 1
        %s700 = scalar_select %p699, %s38, 1
        %s701 = smul.addr %s700, 2
        %s702 = scalar_lea.vmem %s13, %s701
        %p703 = scmp.lt.s32.totalorder %s38, 1
        %s704 = scalar_select %p703, %s38, 1
        %s705 = scalar_lea.vmem %s14, %s704
        %v707 = vld [vmem:[%s0] sm:$0xff]
        %v708 = vld [vmem:[%s0 + $0x8] sm:$0xff]
        %v709 = vld [vmem:[%s0 + $0x10] sm:$0xff]
        %v710 = vld [vmem:[%s0 + $0x18] sm:$0xff]
        %v711 = vld [vmem:[%s1] sm:$0xff]
        %v712 = vld [vmem:[%s1 + $0x8] sm:$0xff]
        %714 = vset.pattern.permute.xlu0 0
        %715 = vperm.xlu0 %714, %v711
        %v716 = vpop.permute.xlu0 %715
        %719 = vset.pattern.permute.xlu0 0
        %720 = vperm.xlu0 %719, %v712
        %v721 = vpop.permute.xlu0 %720
        %v723 = vmul.f32 %v707, %v716
        %v724 = vmul.f32 %v708, %v721
        %v725 = vmul.f32 %v709, %v716
        %v726 = vmul.f32 %v710, %v721
        %v727 = vld [vmem:[%s2] sm:$0xff]
        %v728 = vld [vmem:[%s2 + $0x8] sm:$0xff]
        %730 = vset.pattern.permute.xlu0 0
        %731 = vperm.xlu0 %730, %v727
        %v732 = vpop.permute.xlu0 %731
        %735 = vset.pattern.permute.xlu0 0
        %736 = vperm.xlu0 %735, %v728
        %v737 = vpop.permute.xlu0 %736
        %v739 = vadd.f32 %v723, %v732
        %v740 = vadd.f32 %v724, %v737
        %v741 = vadd.f32 %v725, %v732
        %v742 = vadd.f32 %v726, %v737
        %v743 = vmax.f32 %v739, 0.0
        %v744 = vmax.f32 %v740, 0.0
        %v745 = vmax.f32 %v741, 0.0
        %v746 = vmax.f32 %v742, 0.0
        %vm747 = vcmask 130048
        %v748 = vsel %vm747, %v743, 0.0
        %749 = vadd.xlane.f32.xlu0 %v748
        %v750 = vpop.xlane.xlu0 %749
        %v751 = vsel %vm747, %v744, 0.0
        %752 = vadd.xlane.f32.xlu0 %v751
        %v753 = vpop.xlane.xlu0 %752
        %v754 = vsel %vm747, %v745, 0.0
        %755 = vadd.xlane.f32.xlu0 %v754
        %v756 = vpop.xlane.xlu0 %755
        %v757 = vsel %vm747, %v746, 0.0
        %758 = vadd.xlane.f32.xlu0 %v757
        %v759 = vpop.xlane.xlu0 %758
        %v760 = vpack.c.bf16 %v753, %v750
        %v761 = vpack.c.bf16 %v759, %v756
        %v762 = vld [vmem:[%s607] sm:$0xf]
        %v763 = vld [vmem:[%s607 + $0x4] sm:$0xf]
        %v764 = vld [vmem:[%s614] sm:$0x1]
        %v766 = vlaneseq
        %v767 = vshrl.u32 %v766, 7
        %v768 = vsub.s32 0, %v767
        %v769 = vrot.slane %v764, %v768
        %v773 = vunpack.c.l.b16 %v760
        %v774 = vunpack.c.h.b16 %v760
        %v775 = vunpack.c.l.b16 %v761
        %v776 = vunpack.c.h.b16 %v761
        %v777 = vlaneseq
        %v778 = vand.u32 %v777, 127
        %v779 = vlaneseq
        %v780 = vshrl.u32 %v779, 7
        %v781 = vsub.s32 %v778, %v780
        %v782 = vrot.slane %v773, %v781
        %v783 = vadd.s32 %v778, 4294967288
        %v784 = vlaneseq
        %v785 = vshrl.u32 %v784, 7
        %v786 = vsub.s32 %v783, %v785
        %v787 = vrot.slane %v774, %v786
        %vm788 = vcmask 130112
        %v789 = vsel %vm788, %v787, %v782
        %v790 = vlaneseq
        %v791 = vshrl.u32 %v790, 7
        %v792 = vsub.s32 %v778, %v791
        %v793 = vrot.slane %v775, %v792
        %v794 = vlaneseq
        %v795 = vshrl.u32 %v794, 7
        %v796 = vsub.s32 %v783, %v795
        %v797 = vrot.slane %v776, %v796
        %v798 = vsel %vm788, %v797, %v793
        %vm799 = vcmask 1041409
        %v800 = vsel %vm799, %v798, %v789
        %v801 = vpack.c.b16 %v800, %v800
        %v804 = vunpack.c.l.b16 %v762
        %v805 = vunpack.c.l.b16 %v763
        %v806 = vpack.c.b16 %v805, %v804
        %v809 = vsel %vm747, %v801, 0
        %811 = vmatprep.subr.bf16.mxu0 0
        %812 = vmatpush1.bf16.msra.mxu0 %v806
        %813 = vmatprep.subr.bf16.mxu0 0
        %814 = vmatpush1.bf16.msra.mxu0 0
        %815 = vmatprep.subr.bf16.mxu0 0
        %816 = vmatpush1.bf16.msra.mxu0 0
        %817 = vmatprep.subr.bf16.mxu0 0
        %818 = vmatpush1.bf16.msra.mxu0 0
        %819 = vmatprep.subr.bf16.mxu0 0
        %820 = vmatpush1.bf16.msra.mxu0 0
        %821 = vmatprep.subr.bf16.mxu0 0
        %822 = vmatpush1.bf16.msra.mxu0 0
        %823 = vmatprep.subr.bf16.mxu0 0
        %824 = vmatpush1.bf16.msra.mxu0 0
        %825 = vmatprep.subr.bf16.mxu0 0
        %826 = vmatpush1.bf16.msra.mxu0 0
        %827 = vmatprep.subr.bf16.mxu0 0
        %828 = vmatpush1.bf16.msra.mxu0 0
        %829 = vmatprep.subr.bf16.mxu0 0
        %830 = vmatpush1.bf16.msra.mxu0 0
        %831 = vmatprep.subr.bf16.mxu0 0
        %832 = vmatpush1.bf16.msra.mxu0 0
        %833 = vmatprep.subr.bf16.mxu0 0
        %834 = vmatpush1.bf16.msra.mxu0 0
        %835 = vmatprep.subr.bf16.mxu0 0
        %836 = vmatpush1.bf16.msra.mxu0 0
        %837 = vmatprep.subr.bf16.mxu0 0
        %838 = vmatpush1.bf16.msra.mxu0 0
        %839 = vmatprep.subr.bf16.mxu0 0
        %840 = vmatpush1.bf16.msra.mxu0 0
        %841 = vmatprep.subr.bf16.mxu0 0
        %842 = vmatpush1.bf16.msra.mxu0 0
        %843 = vmatprep.mubr.bf16.mxu0 0
        %844 = vmatmul.mubr.bf16.gmra.mrb[0].mxu0 %v809
        %v845 = vpop.f32.mrb[0].mxu0
        %v846 = vadd.f32 %v769, %v845
        %v847 = vpop.f32.mrb[0].mxu0
        %v848 = vpop.f32.mrb[0].mxu0
        %v849 = vpop.f32.mrb[0].mxu0
        %850 = vdwg.mxu0
        %851 = vst [vmem:[%s677] sm:$0x3] %v846
        %v852 = vld [vmem:[%s5] sm:$0xff]
        %v853 = vld [vmem:[%s5 + $0x8] sm:$0xff]
        %v854 = vld [vmem:[%s6] sm:$0xff]
        %856 = vset.pattern.permute.xlu0 0
        %857 = vperm.xlu0 %856, %v854
        %v858 = vpop.permute.xlu0 %857
        %v860 = vmul.f32 %v852, %v858
        %v861 = vmul.f32 %v853, %v858
        %v862 = vld [vmem:[%s7] sm:$0xff]
        %864 = vset.pattern.permute.xlu0 0
        %865 = vperm.xlu0 %864, %v862
        %v866 = vpop.permute.xlu0 %865
        %v868 = vadd.f32 %v860, %v866
        %v869 = vadd.f32 %v861, %v866
        %v870 = vmax.f32 %v868, 0.0
        %v871 = vmax.f32 %v869, 0.0
        %vm872 = vcmask 523264
        %v873 = vsel %vm872, %v870, 0.0
        %874 = vadd.xlane.f32.xlu0 %v873
        %v875 = vpop.xlane.xlu0 %874
        %v876 = vsel %vm872, %v871, 0.0
        %877 = vadd.xlane.f32.xlu0 %v876
        %v878 = vpop.xlane.xlu0 %877
        %v879 = vpack.c.bf16 %v875, %v875
        %v880 = vpack.c.bf16 %v878, %v878
        %v881 = vld [vmem:[%s695] sm:$0xf]
        %v882 = vld [vmem:[%s698] sm:$0x1]
        %v884 = vlaneseq
        %v885 = vshrl.u32 %v884, 7
        %v886 = vsub.s32 0, %v885
        %v887 = vrot.slane %v882, %v886
        %v891 = vunpack.c.l.b16 %v879
        %v892 = vunpack.c.l.b16 %v880
        %v893 = vlaneseq
        %v894 = vshrl.u32 %v893, 7
        %v895 = vsub.s32 %v778, %v894
        %v896 = vrot.slane %v891, %v895
        %v897 = vlaneseq
        %v898 = vshrl.u32 %v897, 7
        %v899 = vsub.s32 %v778, %v898
        %v900 = vrot.slane %v892, %v899
        %v901 = vsel %vm799, %v900, %v896
        %v902 = vpack.c.b16 %v901, %v901
        %vm903 = vcmask 64512
        %v905 = vsel %vm903, %v902, 0
        %vm907 = vcmask 1043456
        %v909 = vsel %vm907, %v881, 0
        %911 = vmatprep.subr.bf16.mxu0 0
        %912 = vmatpush1.bf16.msra.mxu0 %v909
        %913 = vmatprep.subr.bf16.mxu0 0
        %914 = vmatpush1.bf16.msra.mxu0 0
        %915 = vmatprep.subr.bf16.mxu0 0
        %916 = vmatpush1.bf16.msra.mxu0 0
        %917 = vmatprep.subr.bf16.mxu0 0
        %918 = vmatpush1.bf16.msra.mxu0 0
        %919 = vmatprep.subr.bf16.mxu0 0
        %920 = vmatpush1.bf16.msra.mxu0 0
        %921 = vmatprep.subr.bf16.mxu0 0
        %922 = vmatpush1.bf16.msra.mxu0 0
        %923 = vmatprep.subr.bf16.mxu0 0
        %924 = vmatpush1.bf16.msra.mxu0 0
        %925 = vmatprep.subr.bf16.mxu0 0
        %926 = vmatpush1.bf16.msra.mxu0 0
        %927 = vmatprep.subr.bf16.mxu0 0
        %928 = vmatpush1.bf16.msra.mxu0 0
        %929 = vmatprep.subr.bf16.mxu0 0
        %930 = vmatpush1.bf16.msra.mxu0 0
        %931 = vmatprep.subr.bf16.mxu0 0
        %932 = vmatpush1.bf16.msra.mxu0 0
        %933 = vmatprep.subr.bf16.mxu0 0
        %934 = vmatpush1.bf16.msra.mxu0 0
        %935 = vmatprep.subr.bf16.mxu0 0
        %936 = vmatpush1.bf16.msra.mxu0 0
        %937 = vmatprep.subr.bf16.mxu0 0
        %938 = vmatpush1.bf16.msra.mxu0 0
        %939 = vmatprep.subr.bf16.mxu0 0
        %940 = vmatpush1.bf16.msra.mxu0 0
        %941 = vmatprep.subr.bf16.mxu0 0
        %942 = vmatpush1.bf16.msra.mxu0 0
        %943 = vmatprep.mubr.bf16.mxu0 0
        %944 = vmatmul.mubr.bf16.gmra.mrb[0].mxu0 %v905
        %v945 = vpop.f32.mrb[0].mxu0
        %v946 = vadd.f32 %v887, %v945
        %v947 = vpop.f32.mrb[0].mxu0
        %v948 = vpop.f32.mrb[0].mxu0
        %v949 = vpop.f32.mrb[0].mxu0
        %950 = vdwg.mxu0
        %951 = vst [vmem:[%s684] sm:$0x3] %v946
        %v952 = vld [vmem:[%s10] sm:$0xff]
        %v953 = vld [vmem:[%s10 + $0x8] sm:$0xff]
        %v954 = vld [vmem:[%s11] sm:$0xf]
        %956 = vset.pattern.permute.xlu0 0
        %957 = vperm.xlu0 %956, %v954
        %v958 = vpop.permute.xlu0 %957
        %v960 = vunpack.c.l.s4 839922192
        %v961 = vunpack.c.0.s8 %v960
        %v962 = vlaneseq
        %v963 = vshrl.u32 %v962, 7
        %v964 = vsub.s32 %v961, %v963
        %v965 = vrot.slane %v958, %v964
        %v967 = vmul.f32 %v952, %v965
        %v968 = vmul.f32 %v953, %v965
        %v969 = vld [vmem:[%s12] sm:$0xf]
        %971 = vset.pattern.permute.xlu0 0
        %972 = vperm.xlu0 %971, %v969
        %v973 = vpop.permute.xlu0 %972
        %v975 = vunpack.c.l.s4 839922192
        %v976 = vunpack.c.0.s8 %v975
        %v977 = vlaneseq
        %v978 = vshrl.u32 %v977, 7
        %v979 = vsub.s32 %v976, %v978
        %v980 = vrot.slane %v973, %v979
        %v982 = vadd.f32 %v967, %v980
        %v983 = vadd.f32 %v968, %v980
        %v984 = vmax.f32 %v982, 0.0
        %v985 = vmax.f32 %v983, 0.0
        %v988 = vcombine.high %v984, %v984
        %v989 = vcombine.high %v985, %v985
        %v992 = vsel %vm907, %v984, 0.0
        %v993 = vsel %vm907, %v988, 0.0
        %v994 = vadd.f32 %v992, %v993
        %995 = vadd.xlane.f32.xlu0 %v994
        %v996 = vpop.xlane.xlu0 %995
        %v997 = vsel %vm907, %v985, 0.0
        %v998 = vsel %vm907, %v989, 0.0
        %v999 = vadd.f32 %v997, %v998
        %1000 = vadd.xlane.f32.xlu0 %v999
        %v1001 = vpop.xlane.xlu0 %1000
        %v1002 = vpack.c.bf16 %v996, %v996
        %v1003 = vpack.c.bf16 %v1001, %v1001
        %v1004 = vld [vmem:[%s702] sm:$0x3]
        %v1005 = vld [vmem:[%s705] sm:$0x1]
        %v1007 = vlaneseq
        %v1008 = vshrl.u32 %v1007, 7
        %v1009 = vsub.s32 0, %v1008
        %v1010 = vrot.slane %v1005, %v1009
        %v1014 = vunpack.c.l.b16 %v1002
        %v1015 = vunpack.c.l.b16 %v1003
        %v1016 = vlaneseq
        %v1017 = vshrl.u32 %v1016, 7
        %v1018 = vsub.s32 %v778, %v1017
        %v1019 = vrot.slane %v1014, %v1018
        %v1020 = vlaneseq
        %v1021 = vshrl.u32 %v1020, 7
        %v1022 = vsub.s32 %v778, %v1021
        %v1023 = vrot.slane %v1015, %v1022
        %v1024 = vsel %vm799, %v1023, %v1019
        %v1025 = vpack.c.b16 %v1024, %v1024
        %vm1026 = vcmask 31744
        %v1028 = vsel %vm1026, %v1025, 0
        %vm1030 = vcmask 1041408
        %v1032 = vsel %vm1030, %v1004, 0
        %1034 = vmatprep.subr.bf16.mxu0 0
        %1035 = vmatpush1.bf16.msra.mxu0 %v1032
        %1036 = vmatprep.subr.bf16.mxu0 0
        %1037 = vmatpush1.bf16.msra.mxu0 0
        %1038 = vmatprep.subr.bf16.mxu0 0
        %1039 = vmatpush1.bf16.msra.mxu0 0
        %1040 = vmatprep.subr.bf16.mxu0 0
        %1041 = vmatpush1.bf16.msra.mxu0 0
        %1042 = vmatprep.subr.bf16.mxu0 0
        %1043 = vmatpush1.bf16.msra.mxu0 0
        %1044 = vmatprep.subr.bf16.mxu0 0
        %1045 = vmatpush1.bf16.msra.mxu0 0
        %1046 = vmatprep.subr.bf16.mxu0 0
        %1047 = vmatpush1.bf16.msra.mxu0 0
        %1048 = vmatprep.subr.bf16.mxu0 0
        %1049 = vmatpush1.bf16.msra.mxu0 0
        %1050 = vmatprep.subr.bf16.mxu0 0
        %1051 = vmatpush1.bf16.msra.mxu0 0
        %1052 = vmatprep.subr.bf16.mxu0 0
        %1053 = vmatpush1.bf16.msra.mxu0 0
        %1054 = vmatprep.subr.bf16.mxu0 0
        %1055 = vmatpush1.bf16.msra.mxu0 0
        %1056 = vmatprep.subr.bf16.mxu0 0
        %1057 = vmatpush1.bf16.msra.mxu0 0
        %1058 = vmatprep.subr.bf16.mxu0 0
        %1059 = vmatpush1.bf16.msra.mxu0 0
        %1060 = vmatprep.subr.bf16.mxu0 0
        %1061 = vmatpush1.bf16.msra.mxu0 0
        %1062 = vmatprep.subr.bf16.mxu0 0
        %1063 = vmatpush1.bf16.msra.mxu0 0
        %1064 = vmatprep.subr.bf16.mxu0 0
        %1065 = vmatpush1.bf16.msra.mxu0 0
        %1066 = vmatprep.mubr.bf16.mxu0 0
        %1067 = vmatmul.mubr.bf16.gmra.mrb[0].mxu0 %v1028
        %v1068 = vpop.f32.mrb[0].mxu0
        %v1069 = vadd.f32 %v1010, %v1068
        %v1070 = vpop.f32.mrb[0].mxu0
        %v1071 = vpop.f32.mrb[0].mxu0
        %v1072 = vpop.f32.mrb[0].mxu0
        %1073 = vdwg.mxu0
        %1074 = vst [vmem:[%s691] sm:$0x3] %v1069
        %s1075 = sand.u32 %s391, 1
        %s1076 = scalar_lea.sflag [#allocation5], %s1075
        %s1077 = sand.u32 %s391, 1
        %s1078 = smul.addr %s1077, 2
        %s1079 = scalar_lea.vmem [#allocation6], %s1078
        %s1080 = sand.u32 %s38, 1
        %s1081 = scalar_lea.sflag [#allocation8], %s1080
        %s1082 = sand.u32 %s417, 1
        %s1083 = smul.addr %s1082, 2
        %s1084 = scalar_lea.vmem [#allocation7], %s1083
        %s1085 = sand.u32 %s38, 1
        %s1086 = scalar_lea.sflag [#allocation8], %s1085
        %s1087 = sand.u32 %s443, 1
        %s1088 = smul.addr %s1087, 2
        %s1089 = scalar_lea.vmem [#allocation9], %s1088
        // Predicated region
        $region126: #{tpu_custom_call.1} parent=116 // pred_check
          %p1090 = pneg %p401
        $region127: #{tpu_custom_call.1} parent=116 // pred_check_branch
          %1092 = sbr.rel (%p1090) target = $region129
        $region128: #{tpu_custom_call.1} parent=116 // pred_region
          %s1094 = ssub.s32 32, 32
          %1095 = vsyncadd %s1076, %s1094
          %s1096 = smul.addr %s38, 32
          %s1097 = scalar_lea.hbm %s15, %s1096
          %s1099 = sshll.u32 %s1079, 4
          %s1100 = int_to_ptr.vmem [resolvable:$true] %s1099
          %1102 = dma.vmem_to_hbm [thread:$0]  %s1100, 32, %s1097, %s1076
        $region129: #{tpu_custom_call.1} parent=116 // pred_fallthru
          _
        // Predicated region
        $region130: #{tpu_custom_call.1} parent=116 // pred_check
          %p1103 = pneg %p427
        $region131: #{tpu_custom_call.1} parent=116 // pred_check_branch
          %1105 = sbr.rel (%p1103) target = $region133
        $region132: #{tpu_custom_call.1} parent=116 // pred_region
          %s1107 = ssub.s32 32, 32
          %1108 = vsyncadd %s1081, %s1107
          %s1109 = smul.addr %s38, 32
          %s1110 = scalar_lea.hbm %s16, %s1109
          %s1112 = sshll.u32 %s1084, 4
          %s1113 = int_to_ptr.vmem [resolvable:$true] %s1112
          %1115 = dma.vmem_to_hbm [thread:$0]  %s1113, 32, %s1110, %s1081
        $region133: #{tpu_custom_call.1} parent=116 // pred_fallthru
          _
        // Predicated region
        $region134: #{tpu_custom_call.1} parent=116 // pred_check
          %p1116 = pneg %p453
        $region135: #{tpu_custom_call.1} parent=116 // pred_check_branch
          %1118 = sbr.rel (%p1116) target = $region137
        $region136: #{tpu_custom_call.1} parent=116 // pred_region
          %s1120 = ssub.s32 32, 32
          %1121 = vsyncadd %s1086, %s1120
          %s1122 = smul.addr %s38, 32
          %s1123 = scalar_lea.hbm %s17, %s1122
          %s1125 = sshll.u32 %s1089, 4
          %s1126 = int_to_ptr.vmem [resolvable:$true] %s1125
          %1128 = dma.vmem_to_hbm [thread:$0]  %s1126, 32, %s1123, %s1086
        $region137: #{tpu_custom_call.1} parent=116 // pred_fallthru
          _
      $region117: #{tpu_custom_call.1} parent=5 // pred_fallthru
        _
      %p1129 = scmp.le.s32.totalorder 2, %s33
      // Predicated region
      $region138: #{tpu_custom_call.1} parent=5 // pred_check
        %p1130 = pneg %p1129
      $region139: #{tpu_custom_call.1} parent=5 // pred_check_branch
        %1132 = sbr.rel (%p1130) target = $region141
      $region140: #{tpu_custom_call.1} parent=5 // pred_region
        %s1133 = ssub.s32 %s33, 2
        // Predicated region
        $region142: #{tpu_custom_call.1} parent=140 // pred_check
          %p1134 = pneg %p407
        $region143: #{tpu_custom_call.1} parent=140 // pred_check_branch
          %1136 = sbr.rel (%p1134) target = $region145
        $region144: #{tpu_custom_call.1} parent=140 // pred_region
          %s1137 = sand.u32 %s392, 1
          %s1138 = scalar_lea.sflag [#allocation5], %s1137
          %s1139 = sand.u32 %s392, 1
          %s1140 = smul.addr %s1139, 2
          %s1141 = scalar_lea.vmem [#allocation6], %s1140
          %1142 = dma.done %s1138, 32
        $region145: #{tpu_custom_call.1} parent=140 // pred_fallthru
          _
        // Predicated region
        $region146: #{tpu_custom_call.1} parent=140 // pred_check
          %p1143 = pneg %p433
        $region147: #{tpu_custom_call.1} parent=140 // pred_check_branch
          %1145 = sbr.rel (%p1143) target = $region149
        $region148: #{tpu_custom_call.1} parent=140 // pred_region
          %s1146 = sand.u32 %s39, 1
          %s1147 = scalar_lea.sflag [#allocation8], %s1146
          %s1148 = sand.u32 %s418, 1
          %s1149 = smul.addr %s1148, 2
          %s1150 = scalar_lea.vmem [#allocation7], %s1149
          %1151 = dma.done %s1147, 32
        $region149: #{tpu_custom_call.1} parent=140 // pred_fallthru
          _
        // Predicated region
        $region150: #{tpu_custom_call.1} parent=140 // pred_check
          %p1152 = pneg %p459
        $region151: #{tpu_custom_call.1} parent=140 // pred_check_branch
          %1154 = sbr.rel (%p1152) target = $region153
        $region152: #{tpu_custom_call.1} parent=140 // pred_region
          %s1155 = sand.u32 %s39, 1
          %s1156 = scalar_lea.sflag [#allocation8], %s1155
          %s1157 = sand.u32 %s444, 1
          %s1158 = smul.addr %s1157, 2
          %s1159 = scalar_lea.vmem [#allocation9], %s1158
          %1160 = dma.done %s1156, 32
        $region153: #{tpu_custom_call.1} parent=140 // pred_fallthru
          _
      $region141: #{tpu_custom_call.1} parent=5 // pred_fallthru
        _
    $region6: #{tpu_custom_call.1} parent=1 // loop_footer
      %s37 = sadd.s32 1, %s33
    $region7: #{tpu_custom_call.1} parent=1 // loop_footer_branch
      %32 = sbr.rel target = $region3
    $region8: #{tpu_custom_call.1} parent=1 // loop_exit
      _
    %1161 = vsyncpa [#allocation4], 1
    %s1162 = scalar_lea.sflag [#allocation4], 1
    %1163 = vsyncpa %s1162, 1
    %1164 = vsyncpa [#allocation5], 1
    %s1165 = scalar_lea.sflag [#allocation5], 1
    %1166 = vsyncpa %s1165, 1
    %1167 = vsyncpa [#allocation8], 1
    %s1168 = scalar_lea.sflag [#allocation8], 1
    %1169 = vsyncpa %s1168, 1

</llo_original>
